<compile_context>
chip_gen: v7x
topology: tpu7x:2x2x1
jax: 0.10.0
libtpu: 0.0.40
codegen_flags: <defaults>
</compile_context>

<pallas_src>
import functools

import jax
import jax.numpy as jnp
from jax.experimental import pallas as pl
from jax.experimental.pallas import tpu as pltpu

KSIZE = 5
PAD = 2


def _round_up(x, m):
    return ((x + m - 1) // m) * m


def _vmem_capacity_bytes():
    # Generation-aware VMEM capacity (v5e/v6e: 128 MiB, v7x: 64 MiB per core).
    try:
        info = pltpu.get_tpu_info()
        cap = getattr(info, "vmem_capacity_bytes", None)
        if cap:
            return int(cap)
    except Exception:
        pass
    return 64 << 20  # conservative default (v7x per-core VMEM)


def _strip_vmem_bytes(s_rows, w, n, itemsize):
    # Double-buffered pipeline footprint of one grid step:
    #   main in (s, w+4, n) + halo in (4, w+4, n) + out (s, w, n).
    per_step = ((s_rows + 4) * (w + 2 * PAD) + s_rows * w) * n * itemsize
    return 2 * per_step


def _pick_strip_rows(h, w, n, itemsize, budget_bytes):
    # Largest power-of-two multiple of 8 rows whose double-buffered footprint
    # fits the budget; bigger strips amortize the ~0.35us per-grid-step cost.
    h8 = _round_up(max(h, 8), 8)
    s = 8
    while s * 2 <= h8 and _strip_vmem_bytes(s * 2, w, n, itemsize) <= budget_bytes:
        s *= 2
    return s


def _pick_reg_tiles(s_rows, w, n):
    # Lane tile: multiple of 128 when possible, capped so one (rt, w, nt) fp32
    # accumulator stays roughly vreg-resident.  Row tile rt in {8, 4} (>=4 so
    # interior tiles never need the halo rows).
    acc_budget = 96 * 1024
    if n % 128 == 0:
        nt = 128
        while (nt * 2 <= min(n, 512) and n % (nt * 2) == 0
               and 8 * w * (nt * 2) * 4 <= acc_budget):
            nt *= 2
    else:
        nt = n  # small-n path: keep the whole (under-utilized) lane dim
    rt = 8
    if rt * w * nt * 4 > acc_budget and s_rows % 4 == 0:
        rt = 4
    return rt, nt


def _dwconv_strip_kernel(x_ref, halo_ref, w_ref, o_ref, *, rt, nt):
    # x_ref:    (s_rows, w+4, n)  padded-input rows [i*s, i*s + s)
    # halo_ref: (4,      w+4, n)  padded-input rows [i*s + s, i*s + s + 4)
    # w_ref:    (25, n)           depthwise taps; lane j = b*c + ch
    # o_ref:    (s_rows, w, n)
    s_rows, w_out, n = o_ref.shape
    n_row_tiles = s_rows // rt
    n_lane_tiles = n // nt

    wts_all = w_ref[...].astype(jnp.float32)  # (25, n); resident, loaded once

    def tap_accumulate(load_xj, wk):
        # load_xj(dj): (rt+4, w_out, nt) fp32, w-shifted by dj.  25 taps fully
        # unrolled; acc is a local value seeded by the first tap product.
        acc = None
        for dj in range(KSIZE):
            xj = load_xj(dj)
            for di in range(KSIZE):
                term = xj[di:di + rt] * wk[di * KSIZE + dj]
                acc = term if acc is None else acc + term
        return acc

    for lt in range(n_lane_tiles):            # static lane-tile loop (1..4)
        nb = lt * nt
        wk = [wts_all[k:k + 1, nb:nb + nt].reshape(1, 1, nt)
              for k in range(KSIZE * KSIZE)]

        def row_tile(r, carry):
            base = pl.multiple_of(r * rt, rt)

            def load_xj(dj):
                return x_ref[pl.ds(base, rt + 4),
                             pl.ds(dj, w_out),
                             pl.ds(nb, nt)].astype(jnp.float32)

            acc = tap_accumulate(load_xj, wk)
            o_ref[pl.ds(base, rt), :, pl.ds(nb, nt)] = acc.astype(o_ref.dtype)
            return carry

        # Interior row tiles: every row they touch lives inside x_ref.
        jax.lax.fori_loop(0, n_row_tiles - 1, row_tile, 0, unroll=True)

        # Last row tile of the strip: its bottom taps come from halo_ref.
        base_l = s_rows - rt

        def load_xj_last(dj):
            top = x_ref[pl.ds(base_l, rt), pl.ds(dj, w_out), pl.ds(nb, nt)]
            bot = halo_ref[:, pl.ds(dj, w_out), pl.ds(nb, nt)]
            return jnp.concatenate([top, bot], axis=0).astype(jnp.float32)

        acc = tap_accumulate(load_xj_last, wk)
        o_ref[pl.ds(base_l, rt), :, pl.ds(nb, nt)] = acc.astype(o_ref.dtype)


def dwconv2d_pallas(x_seq, weight, size_2d):
    """Forward of DWConv2d (eval mode) as a Pallas TPU kernel.

    x_seq:  (h*w, bs, c)   -- module input layout
    weight: (c, 1, 5, 5)   -- depthwise conv weight (nn.Conv2d groups=c)
    size_2d: (h, w)
    returns: (h*w, bs, c)
    """
    h, w = size_2d
    hw, bs, c = x_seq.shape
    assert hw == h * w
    n = bs * c
    itemsize = jnp.dtype(x_seq.dtype).itemsize

    vmem_cap = _vmem_capacity_bytes()
    s_rows = _pick_strip_rows(h, w, n, itemsize, budget_bytes=int(vmem_cap * 0.4))
    h_body = _round_up(h, s_rows)
    n_strips = h_body // s_rows
    rt, nt = _pick_reg_tiles(s_rows, w, n)

    need = _strip_vmem_bytes(s_rows, w, n, itemsize)
    vmem_limit = int(min(max(int(need * 1.5) + (8 << 20), 32 << 20),
                         min(100 << 20, int(vmem_cap * 0.85))))

    # (h*w, bs, c) -> (h, w, bs*c): pure view.
    x_hwn = x_seq.reshape(h, w, n)
    # Single wrapper pad (2 rows/cols of zeros each side + bottom fill up to a
    # whole number of strips).  Removes all in-kernel padding work.
    x_pad = jnp.pad(x_hwn, ((PAD, h_body - h + PAD), (PAD, PAD), (0, 0)))

    # (c, 1, 5, 5) -> (25, c) -> tiled over batch -> (25, bs*c); lane j = b*c+ch.
    w_taps = jnp.transpose(weight.reshape(c, KSIZE * KSIZE), (1, 0))
    w_flat = jnp.tile(w_taps, (1, bs))

    halo_blocks = s_rows // 4  # halo block (height 4) index stride per strip

    kernel = functools.partial(_dwconv_strip_kernel, rt=rt, nt=nt)

    out_body = pl.pallas_call(
        kernel,
        out_shape=jax.ShapeDtypeStruct((h_body, w, n), x_seq.dtype),
        grid_spec=pltpu.PrefetchScalarGridSpec(
            num_scalar_prefetch=0,
            grid=(n_strips,),
            in_specs=[
                # main strip rows: auto-pipelined, consumed in place (no copy)
                pl.BlockSpec((s_rows, w + 2 * PAD, n), lambda i: (i, 0, 0)),
                # 4-row bottom halo of the same padded array, also pipelined
                pl.BlockSpec((4, w + 2 * PAD, n),
                             lambda i: ((i + 1) * halo_blocks, 0, 0)),
                # taps: constant block index -> resident across the grid
                pl.BlockSpec((KSIZE * KSIZE, n), lambda i: (0, 0)),
            ],
            out_specs=pl.BlockSpec((s_rows, w, n), lambda i: (i, 0, 0)),
        ),
        compiler_params=pltpu.CompilerParams(
            dimension_semantics=("parallel",),
            vmem_limit_bytes=vmem_limit,
        ),
    )(x_pad, x_pad, w_flat)

    out = out_body if h_body == h else out_body[:h]

    # TODO(synk): Dropout2d(p=0.1) is identity in eval / deterministic mode; not applied.

    # (h, w, bs*c) -> (h*w, bs, c): pure view again.
    return out.reshape(h * w, bs, c)


def _reference(x_seq, weight, size_2d):
    # Pure-JAX reference of the same depthwise conv, for a sanity check.
    h, w = size_2d
    hw, bs, c = x_seq.shape
    x_nchw = jnp.transpose(x_seq.reshape(h, w, bs, c), (2, 3, 0, 1))
    out = jax.lax.conv_general_dilated(
        x_nchw, weight,
        window_strides=(1, 1),
        padding=((PAD, PAD), (PAD, PAD)),
        dimension_numbers=("NCHW", "OIHW", "NCHW"),
        feature_group_count=c,
        precision=jax.lax.Precision.HIGHEST,
    )
    return jnp.transpose(out.reshape(bs, c, h * w), (2, 0, 1))


if __name__ == "__main__":
    key = jax.random.PRNGKey(0)
    bs, c, h, w = 2, 4, 16, 16

    kx, kw = jax.random.split(key)
    # module input: (h*w, bs, c)
    x = jax.random.normal(kx, (h * w, bs, c), dtype=jnp.float32)
    # depthwise conv weight: (c, 1, 5, 5), deterministic init
    weight = jax.random.normal(kw, (c, 1, KSIZE, KSIZE), dtype=jnp.float32) * 0.1

    out = dwconv2d_pallas(x, weight, (h, w))
    out = jax.block_until_ready(out)

    ref = _reference(x, weight, (h, w))
    assert out.shape == (h * w, bs, c)
    assert jnp.allclose(out, ref, atol=1e-5, rtol=1e-5)

    print("KERNEL_OK")
</pallas_src>

<mosaic_0001>
module attributes {stable_mosaic.version = 11 : i64} {
  func.func @_dwconv_strip_kernel(%arg0: i32, %arg1: memref<16x20x8xf32, #tpu.memory_space<vmem>>, %arg2: memref<4x20x8xf32, #tpu.memory_space<vmem>>, %arg3: memref<25x8xf32, #tpu.memory_space<vmem>>, %arg4: memref<16x16x8xf32, #tpu.memory_space<vmem>>) attributes {dimension_semantics = [#tpu.dimension_semantics<parallel>], iteration_bounds = array<i64: 1>, scalar_prefetch = 0 : i64, scratch_operands = 0 : i64, tpu.core_type = #tpu.core_type<tc>, window_params = [{transform_indices = @transform_0, window_bounds = array<i64: 16, 20, 8>}, {transform_indices = @transform_1, window_bounds = array<i64: 4, 20, 8>}, {pipeline_mode = #tpu.pipeline_mode<synchronous>, transform_indices = @transform_2, window_bounds = array<i64: 25, 8>}, {transform_indices = @transform_3, window_bounds = array<i64: 16, 16, 8>}]} {
    %c0 = arith.constant 0 : index
    %c0_0 = arith.constant 0 : index
    %0 = vector.load %arg3[%c0, %c0_0] : memref<25x8xf32, #tpu.memory_space<vmem>>, vector<25x8xf32>
    %1 = vector.extract_strided_slice %0 {offsets = [0, 0], sizes = [1, 8], strides = [1, 1]} : vector<25x8xf32> to vector<1x8xf32>
    %2 = vector.shape_cast %1 : vector<1x8xf32> to vector<1x1x8xf32>
    %3 = vector.extract_strided_slice %0 {offsets = [1, 0], sizes = [1, 8], strides = [1, 1]} : vector<25x8xf32> to vector<1x8xf32>
    %4 = vector.shape_cast %3 : vector<1x8xf32> to vector<1x1x8xf32>
    %5 = vector.extract_strided_slice %0 {offsets = [2, 0], sizes = [1, 8], strides = [1, 1]} : vector<25x8xf32> to vector<1x8xf32>
    %6 = vector.shape_cast %5 : vector<1x8xf32> to vector<1x1x8xf32>
    %7 = vector.extract_strided_slice %0 {offsets = [3, 0], sizes = [1, 8], strides = [1, 1]} : vector<25x8xf32> to vector<1x8xf32>
    %8 = vector.shape_cast %7 : vector<1x8xf32> to vector<1x1x8xf32>
    %9 = vector.extract_strided_slice %0 {offsets = [4, 0], sizes = [1, 8], strides = [1, 1]} : vector<25x8xf32> to vector<1x8xf32>
    %10 = vector.shape_cast %9 : vector<1x8xf32> to vector<1x1x8xf32>
    %11 = vector.extract_strided_slice %0 {offsets = [5, 0], sizes = [1, 8], strides = [1, 1]} : vector<25x8xf32> to vector<1x8xf32>
    %12 = vector.shape_cast %11 : vector<1x8xf32> to vector<1x1x8xf32>
    %13 = vector.extract_strided_slice %0 {offsets = [6, 0], sizes = [1, 8], strides = [1, 1]} : vector<25x8xf32> to vector<1x8xf32>
    %14 = vector.shape_cast %13 : vector<1x8xf32> to vector<1x1x8xf32>
    %15 = vector.extract_strided_slice %0 {offsets = [7, 0], sizes = [1, 8], strides = [1, 1]} : vector<25x8xf32> to vector<1x8xf32>
    %16 = vector.shape_cast %15 : vector<1x8xf32> to vector<1x1x8xf32>
    %17 = vector.extract_strided_slice %0 {offsets = [8, 0], sizes = [1, 8], strides = [1, 1]} : vector<25x8xf32> to vector<1x8xf32>
    %18 = vector.shape_cast %17 : vector<1x8xf32> to vector<1x1x8xf32>
    %19 = vector.extract_strided_slice %0 {offsets = [9, 0], sizes = [1, 8], strides = [1, 1]} : vector<25x8xf32> to vector<1x8xf32>
    %20 = vector.shape_cast %19 : vector<1x8xf32> to vector<1x1x8xf32>
    %21 = vector.extract_strided_slice %0 {offsets = [10, 0], sizes = [1, 8], strides = [1, 1]} : vector<25x8xf32> to vector<1x8xf32>
    %22 = vector.shape_cast %21 : vector<1x8xf32> to vector<1x1x8xf32>
    %23 = vector.extract_strided_slice %0 {offsets = [11, 0], sizes = [1, 8], strides = [1, 1]} : vector<25x8xf32> to vector<1x8xf32>
    %24 = vector.shape_cast %23 : vector<1x8xf32> to vector<1x1x8xf32>
    %25 = vector.extract_strided_slice %0 {offsets = [12, 0], sizes = [1, 8], strides = [1, 1]} : vector<25x8xf32> to vector<1x8xf32>
    %26 = vector.shape_cast %25 : vector<1x8xf32> to vector<1x1x8xf32>
    %27 = vector.extract_strided_slice %0 {offsets = [13, 0], sizes = [1, 8], strides = [1, 1]} : vector<25x8xf32> to vector<1x8xf32>
    %28 = vector.shape_cast %27 : vector<1x8xf32> to vector<1x1x8xf32>
    %29 = vector.extract_strided_slice %0 {offsets = [14, 0], sizes = [1, 8], strides = [1, 1]} : vector<25x8xf32> to vector<1x8xf32>
    %30 = vector.shape_cast %29 : vector<1x8xf32> to vector<1x1x8xf32>
    %31 = vector.extract_strided_slice %0 {offsets = [15, 0], sizes = [1, 8], strides = [1, 1]} : vector<25x8xf32> to vector<1x8xf32>
    %32 = vector.shape_cast %31 : vector<1x8xf32> to vector<1x1x8xf32>
    %33 = vector.extract_strided_slice %0 {offsets = [16, 0], sizes = [1, 8], strides = [1, 1]} : vector<25x8xf32> to vector<1x8xf32>
    %34 = vector.shape_cast %33 : vector<1x8xf32> to vector<1x1x8xf32>
    %35 = vector.extract_strided_slice %0 {offsets = [17, 0], sizes = [1, 8], strides = [1, 1]} : vector<25x8xf32> to vector<1x8xf32>
    %36 = vector.shape_cast %35 : vector<1x8xf32> to vector<1x1x8xf32>
    %37 = vector.extract_strided_slice %0 {offsets = [18, 0], sizes = [1, 8], strides = [1, 1]} : vector<25x8xf32> to vector<1x8xf32>
    %38 = vector.shape_cast %37 : vector<1x8xf32> to vector<1x1x8xf32>
    %39 = vector.extract_strided_slice %0 {offsets = [19, 0], sizes = [1, 8], strides = [1, 1]} : vector<25x8xf32> to vector<1x8xf32>
    %40 = vector.shape_cast %39 : vector<1x8xf32> to vector<1x1x8xf32>
    %41 = vector.extract_strided_slice %0 {offsets = [20, 0], sizes = [1, 8], strides = [1, 1]} : vector<25x8xf32> to vector<1x8xf32>
    %42 = vector.shape_cast %41 : vector<1x8xf32> to vector<1x1x8xf32>
    %43 = vector.extract_strided_slice %0 {offsets = [21, 0], sizes = [1, 8], strides = [1, 1]} : vector<25x8xf32> to vector<1x8xf32>
    %44 = vector.shape_cast %43 : vector<1x8xf32> to vector<1x1x8xf32>
    %45 = vector.extract_strided_slice %0 {offsets = [22, 0], sizes = [1, 8], strides = [1, 1]} : vector<25x8xf32> to vector<1x8xf32>
    %46 = vector.shape_cast %45 : vector<1x8xf32> to vector<1x1x8xf32>
    %47 = vector.extract_strided_slice %0 {offsets = [23, 0], sizes = [1, 8], strides = [1, 1]} : vector<25x8xf32> to vector<1x8xf32>
    %48 = vector.shape_cast %47 : vector<1x8xf32> to vector<1x1x8xf32>
    %49 = vector.extract_strided_slice %0 {offsets = [24, 0], sizes = [1, 8], strides = [1, 1]} : vector<25x8xf32> to vector<1x8xf32>
    %50 = vector.shape_cast %49 : vector<1x8xf32> to vector<1x1x8xf32>
    %c0_i32 = arith.constant 0 : i32
    %c8_i32 = arith.constant 8 : i32
    %51 = arith.muli %c0_i32, %c8_i32 : i32
    %52 = tpu.assume_multiple %51, 8 : i32
    %53 = arith.index_cast %52 : i32 to index
    %c0_1 = arith.constant 0 : index
    %c0_2 = arith.constant 0 : index
    %54 = vector.load %arg1[%53, %c0_1, %c0_2] : memref<16x20x8xf32, #tpu.memory_space<vmem>>, vector<12x16x8xf32>
    %55 = vector.extract_strided_slice %54 {offsets = [0, 0, 0], sizes = [8, 16, 8], strides = [1, 1, 1]} : vector<12x16x8xf32> to vector<8x16x8xf32>
    %56 = vector.broadcast %2 : vector<1x1x8xf32> to vector<8x16x8xf32>
    %57 = arith.mulf %55, %56 : vector<8x16x8xf32>
    %58 = vector.extract_strided_slice %54 {offsets = [1, 0, 0], sizes = [8, 16, 8], strides = [1, 1, 1]} : vector<12x16x8xf32> to vector<8x16x8xf32>
    %59 = vector.broadcast %12 : vector<1x1x8xf32> to vector<8x16x8xf32>
    %60 = arith.mulf %58, %59 : vector<8x16x8xf32>
    %61 = arith.addf %57, %60 : vector<8x16x8xf32>
    %62 = vector.extract_strided_slice %54 {offsets = [2, 0, 0], sizes = [8, 16, 8], strides = [1, 1, 1]} : vector<12x16x8xf32> to vector<8x16x8xf32>
    %63 = vector.broadcast %22 : vector<1x1x8xf32> to vector<8x16x8xf32>
    %64 = arith.mulf %62, %63 : vector<8x16x8xf32>
    %65 = arith.addf %61, %64 : vector<8x16x8xf32>
    %66 = vector.extract_strided_slice %54 {offsets = [3, 0, 0], sizes = [8, 16, 8], strides = [1, 1, 1]} : vector<12x16x8xf32> to vector<8x16x8xf32>
    %67 = vector.broadcast %32 : vector<1x1x8xf32> to vector<8x16x8xf32>
    %68 = arith.mulf %66, %67 : vector<8x16x8xf32>
    %69 = arith.addf %65, %68 : vector<8x16x8xf32>
    %70 = vector.extract_strided_slice %54 {offsets = [4, 0, 0], sizes = [8, 16, 8], strides = [1, 1, 1]} : vector<12x16x8xf32> to vector<8x16x8xf32>
    %71 = vector.broadcast %42 : vector<1x1x8xf32> to vector<8x16x8xf32>
    %72 = arith.mulf %70, %71 : vector<8x16x8xf32>
    %73 = arith.addf %69, %72 : vector<8x16x8xf32>
    %74 = arith.index_cast %52 : i32 to index
    %c1 = arith.constant 1 : index
    %c0_3 = arith.constant 0 : index
    %75 = vector.load %arg1[%74, %c1, %c0_3] : memref<16x20x8xf32, #tpu.memory_space<vmem>>, vector<12x16x8xf32>
    %76 = vector.extract_strided_slice %75 {offsets = [0, 0, 0], sizes = [8, 16, 8], strides = [1, 1, 1]} : vector<12x16x8xf32> to vector<8x16x8xf32>
    %77 = vector.broadcast %4 : vector<1x1x8xf32> to vector<8x16x8xf32>
    %78 = arith.mulf %76, %77 : vector<8x16x8xf32>
    %79 = arith.addf %73, %78 : vector<8x16x8xf32>
    %80 = vector.extract_strided_slice %75 {offsets = [1, 0, 0], sizes = [8, 16, 8], strides = [1, 1, 1]} : vector<12x16x8xf32> to vector<8x16x8xf32>
    %81 = vector.broadcast %14 : vector<1x1x8xf32> to vector<8x16x8xf32>
    %82 = arith.mulf %80, %81 : vector<8x16x8xf32>
    %83 = arith.addf %79, %82 : vector<8x16x8xf32>
    %84 = vector.extract_strided_slice %75 {offsets = [2, 0, 0], sizes = [8, 16, 8], strides = [1, 1, 1]} : vector<12x16x8xf32> to vector<8x16x8xf32>
    %85 = vector.broadcast %24 : vector<1x1x8xf32> to vector<8x16x8xf32>
    %86 = arith.mulf %84, %85 : vector<8x16x8xf32>
    %87 = arith.addf %83, %86 : vector<8x16x8xf32>
    %88 = vector.extract_strided_slice %75 {offsets = [3, 0, 0], sizes = [8, 16, 8], strides = [1, 1, 1]} : vector<12x16x8xf32> to vector<8x16x8xf32>
    %89 = vector.broadcast %34 : vector<1x1x8xf32> to vector<8x16x8xf32>
    %90 = arith.mulf %88, %89 : vector<8x16x8xf32>
    %91 = arith.addf %87, %90 : vector<8x16x8xf32>
    %92 = vector.extract_strided_slice %75 {offsets = [4, 0, 0], sizes = [8, 16, 8], strides = [1, 1, 1]} : vector<12x16x8xf32> to vector<8x16x8xf32>
    %93 = vector.broadcast %44 : vector<1x1x8xf32> to vector<8x16x8xf32>
    %94 = arith.mulf %92, %93 : vector<8x16x8xf32>
    %95 = arith.addf %91, %94 : vector<8x16x8xf32>
    %96 = arith.index_cast %52 : i32 to index
    %c2 = arith.constant 2 : index
    %c0_4 = arith.constant 0 : index
    %97 = vector.load %arg1[%96, %c2, %c0_4] : memref<16x20x8xf32, #tpu.memory_space<vmem>>, vector<12x16x8xf32>
    %98 = vector.extract_strided_slice %97 {offsets = [0, 0, 0], sizes = [8, 16, 8], strides = [1, 1, 1]} : vector<12x16x8xf32> to vector<8x16x8xf32>
    %99 = vector.broadcast %6 : vector<1x1x8xf32> to vector<8x16x8xf32>
    %100 = arith.mulf %98, %99 : vector<8x16x8xf32>
    %101 = arith.addf %95, %100 : vector<8x16x8xf32>
    %102 = vector.extract_strided_slice %97 {offsets = [1, 0, 0], sizes = [8, 16, 8], strides = [1, 1, 1]} : vector<12x16x8xf32> to vector<8x16x8xf32>
    %103 = vector.broadcast %16 : vector<1x1x8xf32> to vector<8x16x8xf32>
    %104 = arith.mulf %102, %103 : vector<8x16x8xf32>
    %105 = arith.addf %101, %104 : vector<8x16x8xf32>
    %106 = vector.extract_strided_slice %97 {offsets = [2, 0, 0], sizes = [8, 16, 8], strides = [1, 1, 1]} : vector<12x16x8xf32> to vector<8x16x8xf32>
    %107 = vector.broadcast %26 : vector<1x1x8xf32> to vector<8x16x8xf32>
    %108 = arith.mulf %106, %107 : vector<8x16x8xf32>
    %109 = arith.addf %105, %108 : vector<8x16x8xf32>
    %110 = vector.extract_strided_slice %97 {offsets = [3, 0, 0], sizes = [8, 16, 8], strides = [1, 1, 1]} : vector<12x16x8xf32> to vector<8x16x8xf32>
    %111 = vector.broadcast %36 : vector<1x1x8xf32> to vector<8x16x8xf32>
    %112 = arith.mulf %110, %111 : vector<8x16x8xf32>
    %113 = arith.addf %109, %112 : vector<8x16x8xf32>
    %114 = vector.extract_strided_slice %97 {offsets = [4, 0, 0], sizes = [8, 16, 8], strides = [1, 1, 1]} : vector<12x16x8xf32> to vector<8x16x8xf32>
    %115 = vector.broadcast %46 : vector<1x1x8xf32> to vector<8x16x8xf32>
    %116 = arith.mulf %114, %115 : vector<8x16x8xf32>
    %117 = arith.addf %113, %116 : vector<8x16x8xf32>
    %118 = arith.index_cast %52 : i32 to index
    %c3 = arith.constant 3 : index
    %c0_5 = arith.constant 0 : index
    %119 = vector.load %arg1[%118, %c3, %c0_5] : memref<16x20x8xf32, #tpu.memory_space<vmem>>, vector<12x16x8xf32>
    %120 = vector.extract_strided_slice %119 {offsets = [0, 0, 0], sizes = [8, 16, 8], strides = [1, 1, 1]} : vector<12x16x8xf32> to vector<8x16x8xf32>
    %121 = vector.broadcast %8 : vector<1x1x8xf32> to vector<8x16x8xf32>
    %122 = arith.mulf %120, %121 : vector<8x16x8xf32>
    %123 = arith.addf %117, %122 : vector<8x16x8xf32>
    %124 = vector.extract_strided_slice %119 {offsets = [1, 0, 0], sizes = [8, 16, 8], strides = [1, 1, 1]} : vector<12x16x8xf32> to vector<8x16x8xf32>
    %125 = vector.broadcast %18 : vector<1x1x8xf32> to vector<8x16x8xf32>
    %126 = arith.mulf %124, %125 : vector<8x16x8xf32>
    %127 = arith.addf %123, %126 : vector<8x16x8xf32>
    %128 = vector.extract_strided_slice %119 {offsets = [2, 0, 0], sizes = [8, 16, 8], strides = [1, 1, 1]} : vector<12x16x8xf32> to vector<8x16x8xf32>
    %129 = vector.broadcast %28 : vector<1x1x8xf32> to vector<8x16x8xf32>
    %130 = arith.mulf %128, %129 : vector<8x16x8xf32>
    %131 = arith.addf %127, %130 : vector<8x16x8xf32>
    %132 = vector.extract_strided_slice %119 {offsets = [3, 0, 0], sizes = [8, 16, 8], strides = [1, 1, 1]} : vector<12x16x8xf32> to vector<8x16x8xf32>
    %133 = vector.broadcast %38 : vector<1x1x8xf32> to vector<8x16x8xf32>
    %134 = arith.mulf %132, %133 : vector<8x16x8xf32>
    %135 = arith.addf %131, %134 : vector<8x16x8xf32>
    %136 = vector.extract_strided_slice %119 {offsets = [4, 0, 0], sizes = [8, 16, 8], strides = [1, 1, 1]} : vector<12x16x8xf32> to vector<8x16x8xf32>
    %137 = vector.broadcast %48 : vector<1x1x8xf32> to vector<8x16x8xf32>
    %138 = arith.mulf %136, %137 : vector<8x16x8xf32>
    %139 = arith.addf %135, %138 : vector<8x16x8xf32>
    %140 = arith.index_cast %52 : i32 to index
    %c4 = arith.constant 4 : index
    %c0_6 = arith.constant 0 : index
    %141 = vector.load %arg1[%140, %c4, %c0_6] : memref<16x20x8xf32, #tpu.memory_space<vmem>>, vector<12x16x8xf32>
    %142 = vector.extract_strided_slice %141 {offsets = [0, 0, 0], sizes = [8, 16, 8], strides = [1, 1, 1]} : vector<12x16x8xf32> to vector<8x16x8xf32>
    %143 = vector.broadcast %10 : vector<1x1x8xf32> to vector<8x16x8xf32>
    %144 = arith.mulf %142, %143 : vector<8x16x8xf32>
    %145 = arith.addf %139, %144 : vector<8x16x8xf32>
    %146 = vector.extract_strided_slice %141 {offsets = [1, 0, 0], sizes = [8, 16, 8], strides = [1, 1, 1]} : vector<12x16x8xf32> to vector<8x16x8xf32>
    %147 = vector.broadcast %20 : vector<1x1x8xf32> to vector<8x16x8xf32>
    %148 = arith.mulf %146, %147 : vector<8x16x8xf32>
    %149 = arith.addf %145, %148 : vector<8x16x8xf32>
    %150 = vector.extract_strided_slice %141 {offsets = [2, 0, 0], sizes = [8, 16, 8], strides = [1, 1, 1]} : vector<12x16x8xf32> to vector<8x16x8xf32>
    %151 = vector.broadcast %30 : vector<1x1x8xf32> to vector<8x16x8xf32>
    %152 = arith.mulf %150, %151 : vector<8x16x8xf32>
    %153 = arith.addf %149, %152 : vector<8x16x8xf32>
    %154 = vector.extract_strided_slice %141 {offsets = [3, 0, 0], sizes = [8, 16, 8], strides = [1, 1, 1]} : vector<12x16x8xf32> to vector<8x16x8xf32>
    %155 = vector.broadcast %40 : vector<1x1x8xf32> to vector<8x16x8xf32>
    %156 = arith.mulf %154, %155 : vector<8x16x8xf32>
    %157 = arith.addf %153, %156 : vector<8x16x8xf32>
    %158 = vector.extract_strided_slice %141 {offsets = [4, 0, 0], sizes = [8, 16, 8], strides = [1, 1, 1]} : vector<12x16x8xf32> to vector<8x16x8xf32>
    %159 = vector.broadcast %50 : vector<1x1x8xf32> to vector<8x16x8xf32>
    %160 = arith.mulf %158, %159 : vector<8x16x8xf32>
    %161 = arith.addf %157, %160 : vector<8x16x8xf32>
    %162 = arith.index_cast %52 : i32 to index
    %c0_7 = arith.constant 0 : index
    %c0_8 = arith.constant 0 : index
    %163 = vector.load %arg4[%162, %c0_7, %c0_8] : memref<16x16x8xf32, #tpu.memory_space<vmem>>, vector<8x16x8xf32>
    tpu.vector_store %arg4[%162, %c0_7, %c0_8], %161 {strides = array<i32>} : memref<16x16x8xf32, #tpu.memory_space<vmem>>, vector<8x16x8xf32>,
    %c1_i32 = arith.constant 1 : i32
    %c8 = arith.constant 8 : index
    %c0_9 = arith.constant 0 : index
    %c0_10 = arith.constant 0 : index
    %164 = vector.load %arg1[%c8, %c0_9, %c0_10] : memref<16x20x8xf32, #tpu.memory_space<vmem>>, vector<8x16x8xf32>
    %c0_11 = arith.constant 0 : index
    %c0_12 = arith.constant 0 : index
    %c0_13 = arith.constant 0 : index
    %165 = vector.load %arg2[%c0_11, %c0_12, %c0_13] : memref<4x20x8xf32, #tpu.memory_space<vmem>>, vector<4x16x8xf32>
    %166 = tpu.concatenate %164, %165 in 0 : vector<8x16x8xf32>, vector<4x16x8xf32> -> vector<12x16x8xf32>
    %167 = vector.extract_strided_slice %166 {offsets = [0, 0, 0], sizes = [8, 16, 8], strides = [1, 1, 1]} : vector<12x16x8xf32> to vector<8x16x8xf32>
    %168 = vector.broadcast %2 : vector<1x1x8xf32> to vector<8x16x8xf32>
    %169 = arith.mulf %167, %168 : vector<8x16x8xf32>
    %170 = vector.extract_strided_slice %166 {offsets = [1, 0, 0], sizes = [8, 16, 8], strides = [1, 1, 1]} : vector<12x16x8xf32> to vector<8x16x8xf32>
    %171 = vector.broadcast %12 : vector<1x1x8xf32> to vector<8x16x8xf32>
    %172 = arith.mulf %170, %171 : vector<8x16x8xf32>
    %173 = arith.addf %169, %172 : vector<8x16x8xf32>
    %174 = vector.extract_strided_slice %166 {offsets = [2, 0, 0], sizes = [8, 16, 8], strides = [1, 1, 1]} : vector<12x16x8xf32> to vector<8x16x8xf32>
    %175 = vector.broadcast %22 : vector<1x1x8xf32> to vector<8x16x8xf32>
    %176 = arith.mulf %174, %175 : vector<8x16x8xf32>
    %177 = arith.addf %173, %176 : vector<8x16x8xf32>
    %178 = vector.extract_strided_slice %166 {offsets = [3, 0, 0], sizes = [8, 16, 8], strides = [1, 1, 1]} : vector<12x16x8xf32> to vector<8x16x8xf32>
    %179 = vector.broadcast %32 : vector<1x1x8xf32> to vector<8x16x8xf32>
    %180 = arith.mulf %178, %179 : vector<8x16x8xf32>
    %181 = arith.addf %177, %180 : vector<8x16x8xf32>
    %182 = vector.extract_strided_slice %166 {offsets = [4, 0, 0], sizes = [8, 16, 8], strides = [1, 1, 1]} : vector<12x16x8xf32> to vector<8x16x8xf32>
    %183 = vector.broadcast %42 : vector<1x1x8xf32> to vector<8x16x8xf32>
    %184 = arith.mulf %182, %183 : vector<8x16x8xf32>
    %185 = arith.addf %181, %184 : vector<8x16x8xf32>
    %c8_14 = arith.constant 8 : index
    %c1_15 = arith.constant 1 : index
    %c0_16 = arith.constant 0 : index
    %186 = vector.load %arg1[%c8_14, %c1_15, %c0_16] : memref<16x20x8xf32, #tpu.memory_space<vmem>>, vector<8x16x8xf32>
    %c0_17 = arith.constant 0 : index
    %c1_18 = arith.constant 1 : index
    %c0_19 = arith.constant 0 : index
    %187 = vector.load %arg2[%c0_17, %c1_18, %c0_19] : memref<4x20x8xf32, #tpu.memory_space<vmem>>, vector<4x16x8xf32>
    %188 = tpu.concatenate %186, %187 in 0 : vector<8x16x8xf32>, vector<4x16x8xf32> -> vector<12x16x8xf32>
    %189 = vector.extract_strided_slice %188 {offsets = [0, 0, 0], sizes = [8, 16, 8], strides = [1, 1, 1]} : vector<12x16x8xf32> to vector<8x16x8xf32>
    %190 = vector.broadcast %4 : vector<1x1x8xf32> to vector<8x16x8xf32>
    %191 = arith.mulf %189, %190 : vector<8x16x8xf32>
    %192 = arith.addf %185, %191 : vector<8x16x8xf32>
    %193 = vector.extract_strided_slice %188 {offsets = [1, 0, 0], sizes = [8, 16, 8], strides = [1, 1, 1]} : vector<12x16x8xf32> to vector<8x16x8xf32>
    %194 = vector.broadcast %14 : vector<1x1x8xf32> to vector<8x16x8xf32>
    %195 = arith.mulf %193, %194 : vector<8x16x8xf32>
    %196 = arith.addf %192, %195 : vector<8x16x8xf32>
    %197 = vector.extract_strided_slice %188 {offsets = [2, 0, 0], sizes = [8, 16, 8], strides = [1, 1, 1]} : vector<12x16x8xf32> to vector<8x16x8xf32>
    %198 = vector.broadcast %24 : vector<1x1x8xf32> to vector<8x16x8xf32>
    %199 = arith.mulf %197, %198 : vector<8x16x8xf32>
    %200 = arith.addf %196, %199 : vector<8x16x8xf32>
    %201 = vector.extract_strided_slice %188 {offsets = [3, 0, 0], sizes = [8, 16, 8], strides = [1, 1, 1]} : vector<12x16x8xf32> to vector<8x16x8xf32>
    %202 = vector.broadcast %34 : vector<1x1x8xf32> to vector<8x16x8xf32>
    %203 = arith.mulf %201, %202 : vector<8x16x8xf32>
    %204 = arith.addf %200, %203 : vector<8x16x8xf32>
    %205 = vector.extract_strided_slice %188 {offsets = [4, 0, 0], sizes = [8, 16, 8], strides = [1, 1, 1]} : vector<12x16x8xf32> to vector<8x16x8xf32>
    %206 = vector.broadcast %44 : vector<1x1x8xf32> to vector<8x16x8xf32>
    %207 = arith.mulf %205, %206 : vector<8x16x8xf32>
    %208 = arith.addf %204, %207 : vector<8x16x8xf32>
    %c8_20 = arith.constant 8 : index
    %c2_21 = arith.constant 2 : index
    %c0_22 = arith.constant 0 : index
    %209 = vector.load %arg1[%c8_20, %c2_21, %c0_22] : memref<16x20x8xf32, #tpu.memory_space<vmem>>, vector<8x16x8xf32>
    %c0_23 = arith.constant 0 : index
    %c2_24 = arith.constant 2 : index
    %c0_25 = arith.constant 0 : index
    %210 = vector.load %arg2[%c0_23, %c2_24, %c0_25] : memref<4x20x8xf32, #tpu.memory_space<vmem>>, vector<4x16x8xf32>
    %211 = tpu.concatenate %209, %210 in 0 : vector<8x16x8xf32>, vector<4x16x8xf32> -> vector<12x16x8xf32>
    %212 = vector.extract_strided_slice %211 {offsets = [0, 0, 0], sizes = [8, 16, 8], strides = [1, 1, 1]} : vector<12x16x8xf32> to vector<8x16x8xf32>
    %213 = vector.broadcast %6 : vector<1x1x8xf32> to vector<8x16x8xf32>
    %214 = arith.mulf %212, %213 : vector<8x16x8xf32>
    %215 = arith.addf %208, %214 : vector<8x16x8xf32>
    %216 = vector.extract_strided_slice %211 {offsets = [1, 0, 0], sizes = [8, 16, 8], strides = [1, 1, 1]} : vector<12x16x8xf32> to vector<8x16x8xf32>
    %217 = vector.broadcast %16 : vector<1x1x8xf32> to vector<8x16x8xf32>
    %218 = arith.mulf %216, %217 : vector<8x16x8xf32>
    %219 = arith.addf %215, %218 : vector<8x16x8xf32>
    %220 = vector.extract_strided_slice %211 {offsets = [2, 0, 0], sizes = [8, 16, 8], strides = [1, 1, 1]} : vector<12x16x8xf32> to vector<8x16x8xf32>
    %221 = vector.broadcast %26 : vector<1x1x8xf32> to vector<8x16x8xf32>
    %222 = arith.mulf %220, %221 : vector<8x16x8xf32>
    %223 = arith.addf %219, %222 : vector<8x16x8xf32>
    %224 = vector.extract_strided_slice %211 {offsets = [3, 0, 0], sizes = [8, 16, 8], strides = [1, 1, 1]} : vector<12x16x8xf32> to vector<8x16x8xf32>
    %225 = vector.broadcast %36 : vector<1x1x8xf32> to vector<8x16x8xf32>
    %226 = arith.mulf %224, %225 : vector<8x16x8xf32>
    %227 = arith.addf %223, %226 : vector<8x16x8xf32>
    %228 = vector.extract_strided_slice %211 {offsets = [4, 0, 0], sizes = [8, 16, 8], strides = [1, 1, 1]} : vector<12x16x8xf32> to vector<8x16x8xf32>
    %229 = vector.broadcast %46 : vector<1x1x8xf32> to vector<8x16x8xf32>
    %230 = arith.mulf %228, %229 : vector<8x16x8xf32>
    %231 = arith.addf %227, %230 : vector<8x16x8xf32>
    %c8_26 = arith.constant 8 : index
    %c3_27 = arith.constant 3 : index
    %c0_28 = arith.constant 0 : index
    %232 = vector.load %arg1[%c8_26, %c3_27, %c0_28] : memref<16x20x8xf32, #tpu.memory_space<vmem>>, vector<8x16x8xf32>
    %c0_29 = arith.constant 0 : index
    %c3_30 = arith.constant 3 : index
    %c0_31 = arith.constant 0 : index
    %233 = vector.load %arg2[%c0_29, %c3_30, %c0_31] : memref<4x20x8xf32, #tpu.memory_space<vmem>>, vector<4x16x8xf32>
    %234 = tpu.concatenate %232, %233 in 0 : vector<8x16x8xf32>, vector<4x16x8xf32> -> vector<12x16x8xf32>
    %235 = vector.extract_strided_slice %234 {offsets = [0, 0, 0], sizes = [8, 16, 8], strides = [1, 1, 1]} : vector<12x16x8xf32> to vector<8x16x8xf32>
    %236 = vector.broadcast %8 : vector<1x1x8xf32> to vector<8x16x8xf32>
    %237 = arith.mulf %235, %236 : vector<8x16x8xf32>
    %238 = arith.addf %231, %237 : vector<8x16x8xf32>
    %239 = vector.extract_strided_slice %234 {offsets = [1, 0, 0], sizes = [8, 16, 8], strides = [1, 1, 1]} : vector<12x16x8xf32> to vector<8x16x8xf32>
    %240 = vector.broadcast %18 : vector<1x1x8xf32> to vector<8x16x8xf32>
    %241 = arith.mulf %239, %240 : vector<8x16x8xf32>
    %242 = arith.addf %238, %241 : vector<8x16x8xf32>
    %243 = vector.extract_strided_slice %234 {offsets = [2, 0, 0], sizes = [8, 16, 8], strides = [1, 1, 1]} : vector<12x16x8xf32> to vector<8x16x8xf32>
    %244 = vector.broadcast %28 : vector<1x1x8xf32> to vector<8x16x8xf32>
    %245 = arith.mulf %243, %244 : vector<8x16x8xf32>
    %246 = arith.addf %242, %245 : vector<8x16x8xf32>
    %247 = vector.extract_strided_slice %234 {offsets = [3, 0, 0], sizes = [8, 16, 8], strides = [1, 1, 1]} : vector<12x16x8xf32> to vector<8x16x8xf32>
    %248 = vector.broadcast %38 : vector<1x1x8xf32> to vector<8x16x8xf32>
    %249 = arith.mulf %247, %248 : vector<8x16x8xf32>
    %250 = arith.addf %246, %249 : vector<8x16x8xf32>
    %251 = vector.extract_strided_slice %234 {offsets = [4, 0, 0], sizes = [8, 16, 8], strides = [1, 1, 1]} : vector<12x16x8xf32> to vector<8x16x8xf32>
    %252 = vector.broadcast %48 : vector<1x1x8xf32> to vector<8x16x8xf32>
    %253 = arith.mulf %251, %252 : vector<8x16x8xf32>
    %254 = arith.addf %250, %253 : vector<8x16x8xf32>
    %c8_32 = arith.constant 8 : index
    %c4_33 = arith.constant 4 : index
    %c0_34 = arith.constant 0 : index
    %255 = vector.load %arg1[%c8_32, %c4_33, %c0_34] : memref<16x20x8xf32, #tpu.memory_space<vmem>>, vector<8x16x8xf32>
    %c0_35 = arith.constant 0 : index
    %c4_36 = arith.constant 4 : index
    %c0_37 = arith.constant 0 : index
    %256 = vector.load %arg2[%c0_35, %c4_36, %c0_37] : memref<4x20x8xf32, #tpu.memory_space<vmem>>, vector<4x16x8xf32>
    %257 = tpu.concatenate %255, %256 in 0 : vector<8x16x8xf32>, vector<4x16x8xf32> -> vector<12x16x8xf32>
    %258 = vector.extract_strided_slice %257 {offsets = [0, 0, 0], sizes = [8, 16, 8], strides = [1, 1, 1]} : vector<12x16x8xf32> to vector<8x16x8xf32>
    %259 = vector.broadcast %10 : vector<1x1x8xf32> to vector<8x16x8xf32>
    %260 = arith.mulf %258, %259 : vector<8x16x8xf32>
    %261 = arith.addf %254, %260 : vector<8x16x8xf32>
    %262 = vector.extract_strided_slice %257 {offsets = [1, 0, 0], sizes = [8, 16, 8], strides = [1, 1, 1]} : vector<12x16x8xf32> to vector<8x16x8xf32>
    %263 = vector.broadcast %20 : vector<1x1x8xf32> to vector<8x16x8xf32>
    %264 = arith.mulf %262, %263 : vector<8x16x8xf32>
    %265 = arith.addf %261, %264 : vector<8x16x8xf32>
    %266 = vector.extract_strided_slice %257 {offsets = [2, 0, 0], sizes = [8, 16, 8], strides = [1, 1, 1]} : vector<12x16x8xf32> to vector<8x16x8xf32>
    %267 = vector.broadcast %30 : vector<1x1x8xf32> to vector<8x16x8xf32>
    %268 = arith.mulf %266, %267 : vector<8x16x8xf32>
    %269 = arith.addf %265, %268 : vector<8x16x8xf32>
    %270 = vector.extract_strided_slice %257 {offsets = [3, 0, 0], sizes = [8, 16, 8], strides = [1, 1, 1]} : vector<12x16x8xf32> to vector<8x16x8xf32>
    %271 = vector.broadcast %40 : vector<1x1x8xf32> to vector<8x16x8xf32>
    %272 = arith.mulf %270, %271 : vector<8x16x8xf32>
    %273 = arith.addf %269, %272 : vector<8x16x8xf32>
    %274 = vector.extract_strided_slice %257 {offsets = [4, 0, 0], sizes = [8, 16, 8], strides = [1, 1, 1]} : vector<12x16x8xf32> to vector<8x16x8xf32>
    %275 = vector.broadcast %50 : vector<1x1x8xf32> to vector<8x16x8xf32>
    %276 = arith.mulf %274, %275 : vector<8x16x8xf32>
    %277 = arith.addf %273, %276 : vector<8x16x8xf32>
    %c8_38 = arith.constant 8 : index
    %c0_39 = arith.constant 0 : index
    %c0_40 = arith.constant 0 : index
    %278 = vector.load %arg4[%c8_38, %c0_39, %c0_40] : memref<16x16x8xf32, #tpu.memory_space<vmem>>, vector<8x16x8xf32>
    tpu.vector_store %arg4[%c8_38, %c0_39, %c0_40], %277 {strides = array<i32>} : memref<16x16x8xf32, #tpu.memory_space<vmem>>, vector<8x16x8xf32>,
    return
  }
  func.func @transform_0(%arg0: i32) -> (i32, i32, i32) {
    %c0_i32 = arith.constant 0 : i32
    %c0_i32_0 = arith.constant 0 : i32
    %c0_i32_1 = arith.constant 0 : i32
    return %arg0, %c0_i32, %c0_i32_0 : i32, i32, i32
  }
  func.func @transform_1(%arg0: i32) -> (i32, i32, i32) {
    %c1_i32 = arith.constant 1 : i32
    %0 = arith.addi %arg0, %c1_i32 : i32
    %c4_i32 = arith.constant 4 : i32
    %1 = arith.muli %0, %c4_i32 : i32
    %c0_i32 = arith.constant 0 : i32
    %c0_i32_0 = arith.constant 0 : i32
    %c0_i32_1 = arith.constant 0 : i32
    return %1, %c0_i32, %c0_i32_0 : i32, i32, i32
  }
  func.func @transform_2(%arg0: i32) -> (i32, i32) {
    %c0_i32 = arith.constant 0 : i32
    %c0_i32_0 = arith.constant 0 : i32
    %c0_i32_1 = arith.constant 0 : i32
    return %c0_i32, %c0_i32_0 : i32, i32
  }
  func.func @transform_3(%arg0: i32) -> (i32, i32, i32) {
    %c0_i32 = arith.constant 0 : i32
    %c0_i32_0 = arith.constant 0 : i32
    %c0_i32_1 = arith.constant 0 : i32
    return %arg0, %c0_i32, %c0_i32_0 : i32, i32, i32
  }
}

</mosaic_0001>

<llo_original>
// kernel: tpu_custom_call.1
$region0: #{tpu_custom_call.1}
  #allocation0 [shape = 'u32[]', space=smem, size = 0x4, offset = 0x4, fixed_abs, tag = 'smem constant byte address 0x4 - core index']
  #allocation1 [shape = 'u32[144,128]{1,0:T(1,128)}', space=vmem, size = 0x12000, scoped, tag = 'internal scratch']
  %s0 = inlined_call_operand.vmem [shape: f32[20,20,8], index: 0, kind: input, shape index: {}]
  %s1 = inlined_call_operand.vmem [shape: f32[20,20,8], index: 1, kind: input, shape index: {}]
  %s2 = inlined_call_operand.vmem [shape: f32[25,8], index: 2, kind: input, shape index: {}]
  %s3 = inlined_call_operand.vmem [shape: f32[16,16,8], index: 3, kind: output, shape index: {}]
  %s4 = sld [smem:[#allocation0]]
  $region22: #{tpu_custom_call.1} parent=0
    _
  %s6 = ssub.s32 1, %s4
  %s7 = scalar_select 0, %s6, %s4
  // Predicated region
  $region2: #{tpu_custom_call.1} parent=0 // pred_check
    _
  $region3: #{tpu_custom_call.1} parent=0 // pred_check_branch
    %9 = sbr.rel (0) target = $region5
  $region4: #{tpu_custom_call.1} parent=0 // pred_region
    _
  $region5: #{tpu_custom_call.1} parent=0 // pred_fallthru
    _
  // Predicated region
  $region6: #{tpu_custom_call.1} parent=0 // pred_check
    _
  $region7: #{tpu_custom_call.1} parent=0 // pred_check_branch
    %11 = sbr.rel (0) target = $region9
  $region8: #{tpu_custom_call.1} parent=0 // pred_region
    %s12 = sadd.s32 0, 1
    %s13 = smul.u32 %s12, 4
    %s14 = smul.u32 4, %s13
    %p15 = scmp.lt.s32.totalorder %s14, 19
    %s16 = scalar_select %p15, %s14, 19
    %s17 = smul.addr %s16, 3
    %s18 = smul.addr %s17, 8
    %s19 = scalar_lea.vmem %s1, %s18
    %s20 = sadd.s32 0, 1
    %s21 = smul.u32 %s20, 4
    %s22 = smul.u32 4, %s21
  $region9: #{tpu_custom_call.1} parent=0 // pred_fallthru
    _
  // Predicated region
  $region10: #{tpu_custom_call.1} parent=0 // pred_check
    _
  $region11: #{tpu_custom_call.1} parent=0 // pred_check_branch
    %24 = sbr.rel (0) target = $region13
  $region12: #{tpu_custom_call.1} parent=0 // pred_region
    _
  $region13: #{tpu_custom_call.1} parent=0 // pred_fallthru
    _
  %s25 = sadd.s32 0, 1
  %s26 = smul.u32 %s25, 4
  %s27 = smul.u32 4, %s26
  %p28 = scmp.lt.s32.totalorder %s27, 19
  %s29 = scalar_select %p28, %s27, 19
  %s30 = smul.addr %s29, 3
  %s31 = smul.addr %s30, 8
  %s32 = scalar_lea.vmem %s1, %s31
  %s33 = sadd.s32 0, 1
  %s34 = smul.u32 %s33, 4
  %s35 = smul.u32 4, %s34
  %p36 = scmp.lt.s32.totalorder %s35, 19
  %s37 = scalar_select %p36, %s35, 19
  %s38 = smul.addr %s37, 3
  %s39 = smul.addr %s38, 8
  %s40 = scalar_lea.vmem %s1, %s39
  %s41 = sadd.s32 0, 1
  %s42 = smul.u32 %s41, 4
  %s43 = smul.u32 4, %s42
  %v44 = vld [vmem:[%s2] sm:$0xff]
  %v45 = vld [vmem:[%s2 + $0x8] sm:$0xff]
  %v46 = vld [vmem:[%s2 + $0x10] sm:$0xff]
  %v47 = vld [vmem:[%s2 + $0x18] sm:$0x1]
  %s48 = smul.u32 0, 24
  %s49 = scalar_lea.vmem %s0, %s48
  %v50 = vld [vmem:[%s49] sm:$0xff]
  %v51 = vld [vmem:[%s49 + $0x8] sm:$0xff]
  %v52 = vld [vmem:[%s49 + $0x18] sm:$0xff]
  %v53 = vld [vmem:[%s49 + $0x20] sm:$0xff]
  %v54 = vld [vmem:[%s49 + $0x30] sm:$0xff]
  %v55 = vld [vmem:[%s49 + $0x38] sm:$0xff]
  %v56 = vld [vmem:[%s49 + $0x48] sm:$0xff]
  %v57 = vld [vmem:[%s49 + $0x50] sm:$0xff]
  %v58 = vld [vmem:[%s49 + $0x60] sm:$0xff]
  %v59 = vld [vmem:[%s49 + $0x68] sm:$0xff]
  %v60 = vld [vmem:[%s49 + $0x78] sm:$0xff]
  %v61 = vld [vmem:[%s49 + $0x80] sm:$0xff]
  %v62 = vld [vmem:[%s49 + $0x90] sm:$0xff]
  %v63 = vld [vmem:[%s49 + $0x98] sm:$0xff]
  %v64 = vld [vmem:[%s49 + $0xa8] sm:$0xff]
  %v65 = vld [vmem:[%s49 + $0xb0] sm:$0xff]
  %v66 = vld [vmem:[%s49 + $0xc0] sm:$0xff]
  %v67 = vld [vmem:[%s49 + $0xc8] sm:$0xff]
  %v68 = vld [vmem:[%s49 + $0xd8] sm:$0xff]
  %v69 = vld [vmem:[%s49 + $0xe0] sm:$0xff]
  %v70 = vld [vmem:[%s49 + $0xf0] sm:$0xff]
  %v71 = vld [vmem:[%s49 + $0xf8] sm:$0xff]
  %v72 = vld [vmem:[%s49 + $0x108] sm:$0xff]
  %v73 = vld [vmem:[%s49 + $0x110] sm:$0xff]
  %v74 = vlaneseq
  %v75 = vshrl.u32 %v74, 7
  %v76 = vsub.s32 0, %v75
  %v77 = vrot.slane %v44, %v76
  %v78 = vmul.f32 %v50, %v77
  %v79 = vmul.f32 %v51, %v77
  %v80 = vmul.f32 %v52, %v77
  %v81 = vmul.f32 %v53, %v77
  %v82 = vmul.f32 %v54, %v77
  %v83 = vmul.f32 %v55, %v77
  %v84 = vmul.f32 %v56, %v77
  %v85 = vmul.f32 %v57, %v77
  %v86 = vmul.f32 %v58, %v77
  %v87 = vmul.f32 %v59, %v77
  %v88 = vmul.f32 %v60, %v77
  %v89 = vmul.f32 %v61, %v77
  %v90 = vmul.f32 %v62, %v77
  %v91 = vmul.f32 %v63, %v77
  %v92 = vmul.f32 %v64, %v77
  %v93 = vmul.f32 %v65, %v77
  %v94 = vlaneseq
  %v95 = vshrl.u32 %v94, 7
  %v96 = vsub.s32 5, %v95
  %v97 = vrot.slane %v44, %v96
  %v98 = vmul.f32 %v52, %v97
  %v99 = vmul.f32 %v53, %v97
  %v100 = vmul.f32 %v54, %v97
  %v101 = vmul.f32 %v55, %v97
  %v102 = vmul.f32 %v56, %v97
  %v103 = vmul.f32 %v57, %v97
  %v104 = vmul.f32 %v58, %v97
  %v105 = vmul.f32 %v59, %v97
  %v106 = vmul.f32 %v60, %v97
  %v107 = vmul.f32 %v61, %v97
  %v108 = vmul.f32 %v62, %v97
  %v109 = vmul.f32 %v63, %v97
  %v110 = vmul.f32 %v64, %v97
  %v111 = vmul.f32 %v65, %v97
  %v112 = vmul.f32 %v66, %v97
  %v113 = vmul.f32 %v67, %v97
  %v114 = vadd.f32 %v78, %v98
  %v115 = vadd.f32 %v79, %v99
  %v116 = vadd.f32 %v80, %v100
  %v117 = vadd.f32 %v81, %v101
  %v118 = vadd.f32 %v82, %v102
  %v119 = vadd.f32 %v83, %v103
  %v120 = vadd.f32 %v84, %v104
  %v121 = vadd.f32 %v85, %v105
  %v122 = vadd.f32 %v86, %v106
  %v123 = vadd.f32 %v87, %v107
  %v124 = vadd.f32 %v88, %v108
  %v125 = vadd.f32 %v89, %v109
  %v126 = vadd.f32 %v90, %v110
  %v127 = vadd.f32 %v91, %v111
  %v128 = vadd.f32 %v92, %v112
  %v129 = vadd.f32 %v93, %v113
  %v130 = vlaneseq
  %v131 = vshrl.u32 %v130, 7
  %v132 = vsub.s32 2, %v131
  %v133 = vrot.slane %v45, %v132
  %v134 = vmul.f32 %v54, %v133
  %v135 = vmul.f32 %v55, %v133
  %v136 = vmul.f32 %v56, %v133
  %v137 = vmul.f32 %v57, %v133
  %v138 = vmul.f32 %v58, %v133
  %v139 = vmul.f32 %v59, %v133
  %v140 = vmul.f32 %v60, %v133
  %v141 = vmul.f32 %v61, %v133
  %v142 = vmul.f32 %v62, %v133
  %v143 = vmul.f32 %v63, %v133
  %v144 = vmul.f32 %v64, %v133
  %v145 = vmul.f32 %v65, %v133
  %v146 = vmul.f32 %v66, %v133
  %v147 = vmul.f32 %v67, %v133
  %v148 = vmul.f32 %v68, %v133
  %v149 = vmul.f32 %v69, %v133
  %v150 = vadd.f32 %v114, %v134
  %v151 = vadd.f32 %v115, %v135
  %v152 = vadd.f32 %v116, %v136
  %v153 = vadd.f32 %v117, %v137
  %v154 = vadd.f32 %v118, %v138
  %v155 = vadd.f32 %v119, %v139
  %v156 = vadd.f32 %v120, %v140
  %v157 = vadd.f32 %v121, %v141
  %v158 = vadd.f32 %v122, %v142
  %v159 = vadd.f32 %v123, %v143
  %v160 = vadd.f32 %v124, %v144
  %v161 = vadd.f32 %v125, %v145
  %v162 = vadd.f32 %v126, %v146
  %v163 = vadd.f32 %v127, %v147
  %v164 = vadd.f32 %v128, %v148
  %v165 = vadd.f32 %v129, %v149
  %v166 = vlaneseq
  %v167 = vshrl.u32 %v166, 7
  %v168 = vsub.s32 7, %v167
  %v169 = vrot.slane %v45, %v168
  %v170 = vmul.f32 %v56, %v169
  %v171 = vmul.f32 %v57, %v169
  %v172 = vmul.f32 %v58, %v169
  %v173 = vmul.f32 %v59, %v169
  %v174 = vmul.f32 %v60, %v169
  %v175 = vmul.f32 %v61, %v169
  %v176 = vmul.f32 %v62, %v169
  %v177 = vmul.f32 %v63, %v169
  %v178 = vmul.f32 %v64, %v169
  %v179 = vmul.f32 %v65, %v169
  %v180 = vmul.f32 %v66, %v169
  %v181 = vmul.f32 %v67, %v169
  %v182 = vmul.f32 %v68, %v169
  %v183 = vmul.f32 %v69, %v169
  %v184 = vmul.f32 %v70, %v169
  %v185 = vmul.f32 %v71, %v169
  %v186 = vadd.f32 %v150, %v170
  %v187 = vadd.f32 %v151, %v171
  %v188 = vadd.f32 %v152, %v172
  %v189 = vadd.f32 %v153, %v173
  %v190 = vadd.f32 %v154, %v174
  %v191 = vadd.f32 %v155, %v175
  %v192 = vadd.f32 %v156, %v176
  %v193 = vadd.f32 %v157, %v177
  %v194 = vadd.f32 %v158, %v178
  %v195 = vadd.f32 %v159, %v179
  %v196 = vadd.f32 %v160, %v180
  %v197 = vadd.f32 %v161, %v181
  %v198 = vadd.f32 %v162, %v182
  %v199 = vadd.f32 %v163, %v183
  %v200 = vadd.f32 %v164, %v184
  %v201 = vadd.f32 %v165, %v185
  %v202 = vlaneseq
  %v203 = vshrl.u32 %v202, 7
  %v204 = vsub.s32 4, %v203
  %v205 = vrot.slane %v46, %v204
  %v206 = vmul.f32 %v58, %v205
  %v207 = vmul.f32 %v59, %v205
  %v208 = vmul.f32 %v60, %v205
  %v209 = vmul.f32 %v61, %v205
  %v210 = vmul.f32 %v62, %v205
  %v211 = vmul.f32 %v63, %v205
  %v212 = vmul.f32 %v64, %v205
  %v213 = vmul.f32 %v65, %v205
  %v214 = vmul.f32 %v66, %v205
  %v215 = vmul.f32 %v67, %v205
  %v216 = vmul.f32 %v68, %v205
  %v217 = vmul.f32 %v69, %v205
  %v218 = vmul.f32 %v70, %v205
  %v219 = vmul.f32 %v71, %v205
  %v220 = vmul.f32 %v72, %v205
  %v221 = vmul.f32 %v73, %v205
  %v222 = vadd.f32 %v186, %v206
  %v223 = vadd.f32 %v187, %v207
  %v224 = vadd.f32 %v188, %v208
  %v225 = vadd.f32 %v189, %v209
  %v226 = vadd.f32 %v190, %v210
  %v227 = vadd.f32 %v191, %v211
  %v228 = vadd.f32 %v192, %v212
  %v229 = vadd.f32 %v193, %v213
  %v230 = vadd.f32 %v194, %v214
  %v231 = vadd.f32 %v195, %v215
  %v232 = vadd.f32 %v196, %v216
  %v233 = vadd.f32 %v197, %v217
  %v234 = vadd.f32 %v198, %v218
  %v235 = vadd.f32 %v199, %v219
  %v236 = vadd.f32 %v200, %v220
  %v237 = vadd.f32 %v201, %v221
  %v238 = vld [vmem:[%s49 + $0x1] sm:$0xff]
  %v239 = vld [vmem:[%s49 + $0x9] sm:$0xff]
  %v240 = vld [vmem:[%s49 + $0x19] sm:$0xff]
  %v241 = vld [vmem:[%s49 + $0x21] sm:$0xff]
  %v242 = vld [vmem:[%s49 + $0x31] sm:$0xff]
  %v243 = vld [vmem:[%s49 + $0x39] sm:$0xff]
  %v244 = vld [vmem:[%s49 + $0x49] sm:$0xff]
  %v245 = vld [vmem:[%s49 + $0x51] sm:$0xff]
  %v246 = vld [vmem:[%s49 + $0x61] sm:$0xff]
  %v247 = vld [vmem:[%s49 + $0x69] sm:$0xff]
  %v248 = vld [vmem:[%s49 + $0x79] sm:$0xff]
  %v249 = vld [vmem:[%s49 + $0x81] sm:$0xff]
  %v250 = vld [vmem:[%s49 + $0x91] sm:$0xff]
  %v251 = vld [vmem:[%s49 + $0x99] sm:$0xff]
  %v252 = vld [vmem:[%s49 + $0xa9] sm:$0xff]
  %v253 = vld [vmem:[%s49 + $0xb1] sm:$0xff]
  %v254 = vld [vmem:[%s49 + $0xc1] sm:$0xff]
  %v255 = vld [vmem:[%s49 + $0xc9] sm:$0xff]
  %v256 = vld [vmem:[%s49 + $0xd9] sm:$0xff]
  %v257 = vld [vmem:[%s49 + $0xe1] sm:$0xff]
  %v258 = vld [vmem:[%s49 + $0xf1] sm:$0xff]
  %v259 = vld [vmem:[%s49 + $0xf9] sm:$0xff]
  %v260 = vld [vmem:[%s49 + $0x109] sm:$0xff]
  %v261 = vld [vmem:[%s49 + $0x111] sm:$0xff]
  %v262 = vlaneseq
  %v263 = vshrl.u32 %v262, 7
  %v264 = vsub.s32 1, %v263
  %v265 = vrot.slane %v44, %v264
  %v266 = vmul.f32 %v238, %v265
  %v267 = vmul.f32 %v239, %v265
  %v268 = vmul.f32 %v240, %v265
  %v269 = vmul.f32 %v241, %v265
  %v270 = vmul.f32 %v242, %v265
  %v271 = vmul.f32 %v243, %v265
  %v272 = vmul.f32 %v244, %v265
  %v273 = vmul.f32 %v245, %v265
  %v274 = vmul.f32 %v246, %v265
  %v275 = vmul.f32 %v247, %v265
  %v276 = vmul.f32 %v248, %v265
  %v277 = vmul.f32 %v249, %v265
  %v278 = vmul.f32 %v250, %v265
  %v279 = vmul.f32 %v251, %v265
  %v280 = vmul.f32 %v252, %v265
  %v281 = vmul.f32 %v253, %v265
  %v282 = vadd.f32 %v222, %v266
  %v283 = vadd.f32 %v223, %v267
  %v284 = vadd.f32 %v224, %v268
  %v285 = vadd.f32 %v225, %v269
  %v286 = vadd.f32 %v226, %v270
  %v287 = vadd.f32 %v227, %v271
  %v288 = vadd.f32 %v228, %v272
  %v289 = vadd.f32 %v229, %v273
  %v290 = vadd.f32 %v230, %v274
  %v291 = vadd.f32 %v231, %v275
  %v292 = vadd.f32 %v232, %v276
  %v293 = vadd.f32 %v233, %v277
  %v294 = vadd.f32 %v234, %v278
  %v295 = vadd.f32 %v235, %v279
  %v296 = vadd.f32 %v236, %v280
  %v297 = vadd.f32 %v237, %v281
  %v298 = vlaneseq
  %v299 = vshrl.u32 %v298, 7
  %v300 = vsub.s32 6, %v299
  %v301 = vrot.slane %v44, %v300
  %v302 = vmul.f32 %v240, %v301
  %v303 = vmul.f32 %v241, %v301
  %v304 = vmul.f32 %v242, %v301
  %v305 = vmul.f32 %v243, %v301
  %v306 = vmul.f32 %v244, %v301
  %v307 = vmul.f32 %v245, %v301
  %v308 = vmul.f32 %v246, %v301
  %v309 = vmul.f32 %v247, %v301
  %v310 = vmul.f32 %v248, %v301
  %v311 = vmul.f32 %v249, %v301
  %v312 = vmul.f32 %v250, %v301
  %v313 = vmul.f32 %v251, %v301
  %v314 = vmul.f32 %v252, %v301
  %v315 = vmul.f32 %v253, %v301
  %v316 = vmul.f32 %v254, %v301
  %v317 = vmul.f32 %v255, %v301
  %v318 = vadd.f32 %v282, %v302
  %v319 = vadd.f32 %v283, %v303
  %v320 = vadd.f32 %v284, %v304
  %v321 = vadd.f32 %v285, %v305
  %v322 = vadd.f32 %v286, %v306
  %v323 = vadd.f32 %v287, %v307
  %v324 = vadd.f32 %v288, %v308
  %v325 = vadd.f32 %v289, %v309
  %v326 = vadd.f32 %v290, %v310
  %v327 = vadd.f32 %v291, %v311
  %v328 = vadd.f32 %v292, %v312
  %v329 = vadd.f32 %v293, %v313
  %v330 = vadd.f32 %v294, %v314
  %v331 = vadd.f32 %v295, %v315
  %v332 = vadd.f32 %v296, %v316
  %v333 = vadd.f32 %v297, %v317
  %v334 = vlaneseq
  %v335 = vshrl.u32 %v334, 7
  %v336 = vsub.s32 3, %v335
  %v337 = vrot.slane %v45, %v336
  %v338 = vmul.f32 %v242, %v337
  %v339 = vmul.f32 %v243, %v337
  %v340 = vmul.f32 %v244, %v337
  %v341 = vmul.f32 %v245, %v337
  %v342 = vmul.f32 %v246, %v337
  %v343 = vmul.f32 %v247, %v337
  %v344 = vmul.f32 %v248, %v337
  %v345 = vmul.f32 %v249, %v337
  %v346 = vmul.f32 %v250, %v337
  %v347 = vmul.f32 %v251, %v337
  %v348 = vmul.f32 %v252, %v337
  %v349 = vmul.f32 %v253, %v337
  %v350 = vmul.f32 %v254, %v337
  %v351 = vmul.f32 %v255, %v337
  %v352 = vmul.f32 %v256, %v337
  %v353 = vmul.f32 %v257, %v337
  %v354 = vadd.f32 %v318, %v338
  %v355 = vadd.f32 %v319, %v339
  %v356 = vadd.f32 %v320, %v340
  %v357 = vadd.f32 %v321, %v341
  %v358 = vadd.f32 %v322, %v342
  %v359 = vadd.f32 %v323, %v343
  %v360 = vadd.f32 %v324, %v344
  %v361 = vadd.f32 %v325, %v345
  %v362 = vadd.f32 %v326, %v346
  %v363 = vadd.f32 %v327, %v347
  %v364 = vadd.f32 %v328, %v348
  %v365 = vadd.f32 %v329, %v349
  %v366 = vadd.f32 %v330, %v350
  %v367 = vadd.f32 %v331, %v351
  %v368 = vadd.f32 %v332, %v352
  %v369 = vadd.f32 %v333, %v353
  %v370 = vlaneseq
  %v371 = vshrl.u32 %v370, 7
  %v372 = vsub.s32 0, %v371
  %v373 = vrot.slane %v46, %v372
  %v374 = vmul.f32 %v244, %v373
  %v375 = vmul.f32 %v245, %v373
  %v376 = vmul.f32 %v246, %v373
  %v377 = vmul.f32 %v247, %v373
  %v378 = vmul.f32 %v248, %v373
  %v379 = vmul.f32 %v249, %v373
  %v380 = vmul.f32 %v250, %v373
  %v381 = vmul.f32 %v251, %v373
  %v382 = vmul.f32 %v252, %v373
  %v383 = vmul.f32 %v253, %v373
  %v384 = vmul.f32 %v254, %v373
  %v385 = vmul.f32 %v255, %v373
  %v386 = vmul.f32 %v256, %v373
  %v387 = vmul.f32 %v257, %v373
  %v388 = vmul.f32 %v258, %v373
  %v389 = vmul.f32 %v259, %v373
  %v390 = vadd.f32 %v354, %v374
  %v391 = vadd.f32 %v355, %v375
  %v392 = vadd.f32 %v356, %v376
  %v393 = vadd.f32 %v357, %v377
  %v394 = vadd.f32 %v358, %v378
  %v395 = vadd.f32 %v359, %v379
  %v396 = vadd.f32 %v360, %v380
  %v397 = vadd.f32 %v361, %v381
  %v398 = vadd.f32 %v362, %v382
  %v399 = vadd.f32 %v363, %v383
  %v400 = vadd.f32 %v364, %v384
  %v401 = vadd.f32 %v365, %v385
  %v402 = vadd.f32 %v366, %v386
  %v403 = vadd.f32 %v367, %v387
  %v404 = vadd.f32 %v368, %v388
  %v405 = vadd.f32 %v369, %v389
  %v406 = vlaneseq
  %v407 = vshrl.u32 %v406, 7
  %v408 = vsub.s32 5, %v407
  %v409 = vrot.slane %v46, %v408
  %v410 = vmul.f32 %v246, %v409
  %v411 = vmul.f32 %v247, %v409
  %v412 = vmul.f32 %v248, %v409
  %v413 = vmul.f32 %v249, %v409
  %v414 = vmul.f32 %v250, %v409
  %v415 = vmul.f32 %v251, %v409
  %v416 = vmul.f32 %v252, %v409
  %v417 = vmul.f32 %v253, %v409
  %v418 = vmul.f32 %v254, %v409
  %v419 = vmul.f32 %v255, %v409
  %v420 = vmul.f32 %v256, %v409
  %v421 = vmul.f32 %v257, %v409
  %v422 = vmul.f32 %v258, %v409
  %v423 = vmul.f32 %v259, %v409
  %v424 = vmul.f32 %v260, %v409
  %v425 = vmul.f32 %v261, %v409
  %v426 = vadd.f32 %v390, %v410
  %v427 = vadd.f32 %v391, %v411
  %v428 = vadd.f32 %v392, %v412
  %v429 = vadd.f32 %v393, %v413
  %v430 = vadd.f32 %v394, %v414
  %v431 = vadd.f32 %v395, %v415
  %v432 = vadd.f32 %v396, %v416
  %v433 = vadd.f32 %v397, %v417
  %v434 = vadd.f32 %v398, %v418
  %v435 = vadd.f32 %v399, %v419
  %v436 = vadd.f32 %v400, %v420
  %v437 = vadd.f32 %v401, %v421
  %v438 = vadd.f32 %v402, %v422
  %v439 = vadd.f32 %v403, %v423
  %v440 = vadd.f32 %v404, %v424
  %v441 = vadd.f32 %v405, %v425
  %v442 = vld [vmem:[%s49 + $0x2] sm:$0xff]
  %v443 = vld [vmem:[%s49 + $0xa] sm:$0xff]
  %v444 = vld [vmem:[%s49 + $0x1a] sm:$0xff]
  %v445 = vld [vmem:[%s49 + $0x22] sm:$0xff]
  %v446 = vld [vmem:[%s49 + $0x32] sm:$0xff]
  %v447 = vld [vmem:[%s49 + $0x3a] sm:$0xff]
  %v448 = vld [vmem:[%s49 + $0x4a] sm:$0xff]
  %v449 = vld [vmem:[%s49 + $0x52] sm:$0xff]
  %v450 = vld [vmem:[%s49 + $0x62] sm:$0xff]
  %v451 = vld [vmem:[%s49 + $0x6a] sm:$0xff]
  %v452 = vld [vmem:[%s49 + $0x7a] sm:$0xff]
  %v453 = vld [vmem:[%s49 + $0x82] sm:$0xff]
  %v454 = vld [vmem:[%s49 + $0x92] sm:$0xff]
  %v455 = vld [vmem:[%s49 + $0x9a] sm:$0xff]
  %v456 = vld [vmem:[%s49 + $0xaa] sm:$0xff]
  %v457 = vld [vmem:[%s49 + $0xb2] sm:$0xff]
  %v458 = vld [vmem:[%s49 + $0xc2] sm:$0xff]
  %v459 = vld [vmem:[%s49 + $0xca] sm:$0xff]
  %v460 = vld [vmem:[%s49 + $0xda] sm:$0xff]
  %v461 = vld [vmem:[%s49 + $0xe2] sm:$0xff]
  %v462 = vld [vmem:[%s49 + $0xf2] sm:$0xff]
  %v463 = vld [vmem:[%s49 + $0xfa] sm:$0xff]
  %v464 = vld [vmem:[%s49 + $0x10a] sm:$0xff]
  %v465 = vld [vmem:[%s49 + $0x112] sm:$0xff]
  %v466 = vlaneseq
  %v467 = vshrl.u32 %v466, 7
  %v468 = vsub.s32 2, %v467
  %v469 = vrot.slane %v44, %v468
  %v470 = vmul.f32 %v442, %v469
  %v471 = vmul.f32 %v443, %v469
  %v472 = vmul.f32 %v444, %v469
  %v473 = vmul.f32 %v445, %v469
  %v474 = vmul.f32 %v446, %v469
  %v475 = vmul.f32 %v447, %v469
  %v476 = vmul.f32 %v448, %v469
  %v477 = vmul.f32 %v449, %v469
  %v478 = vmul.f32 %v450, %v469
  %v479 = vmul.f32 %v451, %v469
  %v480 = vmul.f32 %v452, %v469
  %v481 = vmul.f32 %v453, %v469
  %v482 = vmul.f32 %v454, %v469
  %v483 = vmul.f32 %v455, %v469
  %v484 = vmul.f32 %v456, %v469
  %v485 = vmul.f32 %v457, %v469
  %v486 = vadd.f32 %v426, %v470
  %v487 = vadd.f32 %v427, %v471
  %v488 = vadd.f32 %v428, %v472
  %v489 = vadd.f32 %v429, %v473
  %v490 = vadd.f32 %v430, %v474
  %v491 = vadd.f32 %v431, %v475
  %v492 = vadd.f32 %v432, %v476
  %v493 = vadd.f32 %v433, %v477
  %v494 = vadd.f32 %v434, %v478
  %v495 = vadd.f32 %v435, %v479
  %v496 = vadd.f32 %v436, %v480
  %v497 = vadd.f32 %v437, %v481
  %v498 = vadd.f32 %v438, %v482
  %v499 = vadd.f32 %v439, %v483
  %v500 = vadd.f32 %v440, %v484
  %v501 = vadd.f32 %v441, %v485
  %v502 = vlaneseq
  %v503 = vshrl.u32 %v502, 7
  %v504 = vsub.s32 7, %v503
  %v505 = vrot.slane %v44, %v504
  %v506 = vmul.f32 %v444, %v505
  %v507 = vmul.f32 %v445, %v505
  %v508 = vmul.f32 %v446, %v505
  %v509 = vmul.f32 %v447, %v505
  %v510 = vmul.f32 %v448, %v505
  %v511 = vmul.f32 %v449, %v505
  %v512 = vmul.f32 %v450, %v505
  %v513 = vmul.f32 %v451, %v505
  %v514 = vmul.f32 %v452, %v505
  %v515 = vmul.f32 %v453, %v505
  %v516 = vmul.f32 %v454, %v505
  %v517 = vmul.f32 %v455, %v505
  %v518 = vmul.f32 %v456, %v505
  %v519 = vmul.f32 %v457, %v505
  %v520 = vmul.f32 %v458, %v505
  %v521 = vmul.f32 %v459, %v505
  %v522 = vadd.f32 %v486, %v506
  %v523 = vadd.f32 %v487, %v507
  %v524 = vadd.f32 %v488, %v508
  %v525 = vadd.f32 %v489, %v509
  %v526 = vadd.f32 %v490, %v510
  %v527 = vadd.f32 %v491, %v511
  %v528 = vadd.f32 %v492, %v512
  %v529 = vadd.f32 %v493, %v513
  %v530 = vadd.f32 %v494, %v514
  %v531 = vadd.f32 %v495, %v515
  %v532 = vadd.f32 %v496, %v516
  %v533 = vadd.f32 %v497, %v517
  %v534 = vadd.f32 %v498, %v518
  %v535 = vadd.f32 %v499, %v519
  %v536 = vadd.f32 %v500, %v520
  %v537 = vadd.f32 %v501, %v521
  %v538 = vlaneseq
  %v539 = vshrl.u32 %v538, 7
  %v540 = vsub.s32 4, %v539
  %v541 = vrot.slane %v45, %v540
  %v542 = vmul.f32 %v446, %v541
  %v543 = vmul.f32 %v447, %v541
  %v544 = vmul.f32 %v448, %v541
  %v545 = vmul.f32 %v449, %v541
  %v546 = vmul.f32 %v450, %v541
  %v547 = vmul.f32 %v451, %v541
  %v548 = vmul.f32 %v452, %v541
  %v549 = vmul.f32 %v453, %v541
  %v550 = vmul.f32 %v454, %v541
  %v551 = vmul.f32 %v455, %v541
  %v552 = vmul.f32 %v456, %v541
  %v553 = vmul.f32 %v457, %v541
  %v554 = vmul.f32 %v458, %v541
  %v555 = vmul.f32 %v459, %v541
  %v556 = vmul.f32 %v460, %v541
  %v557 = vmul.f32 %v461, %v541
  %v558 = vadd.f32 %v522, %v542
  %v559 = vadd.f32 %v523, %v543
  %v560 = vadd.f32 %v524, %v544
  %v561 = vadd.f32 %v525, %v545
  %v562 = vadd.f32 %v526, %v546
  %v563 = vadd.f32 %v527, %v547
  %v564 = vadd.f32 %v528, %v548
  %v565 = vadd.f32 %v529, %v549
  %v566 = vadd.f32 %v530, %v550
  %v567 = vadd.f32 %v531, %v551
  %v568 = vadd.f32 %v532, %v552
  %v569 = vadd.f32 %v533, %v553
  %v570 = vadd.f32 %v534, %v554
  %v571 = vadd.f32 %v535, %v555
  %v572 = vadd.f32 %v536, %v556
  %v573 = vadd.f32 %v537, %v557
  %v574 = vlaneseq
  %v575 = vshrl.u32 %v574, 7
  %v576 = vsub.s32 1, %v575
  %v577 = vrot.slane %v46, %v576
  %v578 = vmul.f32 %v448, %v577
  %v579 = vmul.f32 %v449, %v577
  %v580 = vmul.f32 %v450, %v577
  %v581 = vmul.f32 %v451, %v577
  %v582 = vmul.f32 %v452, %v577
  %v583 = vmul.f32 %v453, %v577
  %v584 = vmul.f32 %v454, %v577
  %v585 = vmul.f32 %v455, %v577
  %v586 = vmul.f32 %v456, %v577
  %v587 = vmul.f32 %v457, %v577
  %v588 = vmul.f32 %v458, %v577
  %v589 = vmul.f32 %v459, %v577
  %v590 = vmul.f32 %v460, %v577
  %v591 = vmul.f32 %v461, %v577
  %v592 = vmul.f32 %v462, %v577
  %v593 = vmul.f32 %v463, %v577
  %v594 = vadd.f32 %v558, %v578
  %v595 = vadd.f32 %v559, %v579
  %v596 = vadd.f32 %v560, %v580
  %v597 = vadd.f32 %v561, %v581
  %v598 = vadd.f32 %v562, %v582
  %v599 = vadd.f32 %v563, %v583
  %v600 = vadd.f32 %v564, %v584
  %v601 = vadd.f32 %v565, %v585
  %v602 = vadd.f32 %v566, %v586
  %v603 = vadd.f32 %v567, %v587
  %v604 = vadd.f32 %v568, %v588
  %v605 = vadd.f32 %v569, %v589
  %v606 = vadd.f32 %v570, %v590
  %v607 = vadd.f32 %v571, %v591
  %v608 = vadd.f32 %v572, %v592
  %v609 = vadd.f32 %v573, %v593
  %v610 = vlaneseq
  %v611 = vshrl.u32 %v610, 7
  %v612 = vsub.s32 6, %v611
  %v613 = vrot.slane %v46, %v612
  %v614 = vmul.f32 %v450, %v613
  %v615 = vmul.f32 %v451, %v613
  %v616 = vmul.f32 %v452, %v613
  %v617 = vmul.f32 %v453, %v613
  %v618 = vmul.f32 %v454, %v613
  %v619 = vmul.f32 %v455, %v613
  %v620 = vmul.f32 %v456, %v613
  %v621 = vmul.f32 %v457, %v613
  %v622 = vmul.f32 %v458, %v613
  %v623 = vmul.f32 %v459, %v613
  %v624 = vmul.f32 %v460, %v613
  %v625 = vmul.f32 %v461, %v613
  %v626 = vmul.f32 %v462, %v613
  %v627 = vmul.f32 %v463, %v613
  %v628 = vmul.f32 %v464, %v613
  %v629 = vmul.f32 %v465, %v613
  %v630 = vadd.f32 %v594, %v614
  %v631 = vadd.f32 %v595, %v615
  %v632 = vadd.f32 %v596, %v616
  %v633 = vadd.f32 %v597, %v617
  %v634 = vadd.f32 %v598, %v618
  %v635 = vadd.f32 %v599, %v619
  %v636 = vadd.f32 %v600, %v620
  %v637 = vadd.f32 %v601, %v621
  %v638 = vadd.f32 %v602, %v622
  %v639 = vadd.f32 %v603, %v623
  %v640 = vadd.f32 %v604, %v624
  %v641 = vadd.f32 %v605, %v625
  %v642 = vadd.f32 %v606, %v626
  %v643 = vadd.f32 %v607, %v627
  %v644 = vadd.f32 %v608, %v628
  %v645 = vadd.f32 %v609, %v629
  %v646 = vld [vmem:[%s49 + $0x3] sm:$0xff]
  %v647 = vld [vmem:[%s49 + $0xb] sm:$0xff]
  %v648 = vld [vmem:[%s49 + $0x1b] sm:$0xff]
  %v649 = vld [vmem:[%s49 + $0x23] sm:$0xff]
  %v650 = vld [vmem:[%s49 + $0x33] sm:$0xff]
  %v651 = vld [vmem:[%s49 + $0x3b] sm:$0xff]
  %v652 = vld [vmem:[%s49 + $0x4b] sm:$0xff]
  %v653 = vld [vmem:[%s49 + $0x53] sm:$0xff]
  %v654 = vld [vmem:[%s49 + $0x63] sm:$0xff]
  %v655 = vld [vmem:[%s49 + $0x6b] sm:$0xff]
  %v656 = vld [vmem:[%s49 + $0x7b] sm:$0xff]
  %v657 = vld [vmem:[%s49 + $0x83] sm:$0xff]
  %v658 = vld [vmem:[%s49 + $0x93] sm:$0xff]
  %v659 = vld [vmem:[%s49 + $0x9b] sm:$0xff]
  %v660 = vld [vmem:[%s49 + $0xab] sm:$0xff]
  %v661 = vld [vmem:[%s49 + $0xb3] sm:$0xff]
  %v662 = vld [vmem:[%s49 + $0xc3] sm:$0xff]
  %v663 = vld [vmem:[%s49 + $0xcb] sm:$0xff]
  %v664 = vld [vmem:[%s49 + $0xdb] sm:$0xff]
  %v665 = vld [vmem:[%s49 + $0xe3] sm:$0xff]
  %v666 = vld [vmem:[%s49 + $0xf3] sm:$0xff]
  %v667 = vld [vmem:[%s49 + $0xfb] sm:$0xff]
  %v668 = vld [vmem:[%s49 + $0x10b] sm:$0xff]
  %v669 = vld [vmem:[%s49 + $0x113] sm:$0xff]
  %v670 = vlaneseq
  %v671 = vshrl.u32 %v670, 7
  %v672 = vsub.s32 3, %v671
  %v673 = vrot.slane %v44, %v672
  %v674 = vmul.f32 %v646, %v673
  %v675 = vmul.f32 %v647, %v673
  %v676 = vmul.f32 %v648, %v673
  %v677 = vmul.f32 %v649, %v673
  %v678 = vmul.f32 %v650, %v673
  %v679 = vmul.f32 %v651, %v673
  %v680 = vmul.f32 %v652, %v673
  %v681 = vmul.f32 %v653, %v673
  %v682 = vmul.f32 %v654, %v673
  %v683 = vmul.f32 %v655, %v673
  %v684 = vmul.f32 %v656, %v673
  %v685 = vmul.f32 %v657, %v673
  %v686 = vmul.f32 %v658, %v673
  %v687 = vmul.f32 %v659, %v673
  %v688 = vmul.f32 %v660, %v673
  %v689 = vmul.f32 %v661, %v673
  %v690 = vadd.f32 %v630, %v674
  %v691 = vadd.f32 %v631, %v675
  %v692 = vadd.f32 %v632, %v676
  %v693 = vadd.f32 %v633, %v677
  %v694 = vadd.f32 %v634, %v678
  %v695 = vadd.f32 %v635, %v679
  %v696 = vadd.f32 %v636, %v680
  %v697 = vadd.f32 %v637, %v681
  %v698 = vadd.f32 %v638, %v682
  %v699 = vadd.f32 %v639, %v683
  %v700 = vadd.f32 %v640, %v684
  %v701 = vadd.f32 %v641, %v685
  %v702 = vadd.f32 %v642, %v686
  %v703 = vadd.f32 %v643, %v687
  %v704 = vadd.f32 %v644, %v688
  %v705 = vadd.f32 %v645, %v689
  %v706 = vlaneseq
  %v707 = vshrl.u32 %v706, 7
  %v708 = vsub.s32 0, %v707
  %v709 = vrot.slane %v45, %v708
  %v710 = vmul.f32 %v648, %v709
  %v711 = vmul.f32 %v649, %v709
  %v712 = vmul.f32 %v650, %v709
  %v713 = vmul.f32 %v651, %v709
  %v714 = vmul.f32 %v652, %v709
  %v715 = vmul.f32 %v653, %v709
  %v716 = vmul.f32 %v654, %v709
  %v717 = vmul.f32 %v655, %v709
  %v718 = vmul.f32 %v656, %v709
  %v719 = vmul.f32 %v657, %v709
  %v720 = vmul.f32 %v658, %v709
  %v721 = vmul.f32 %v659, %v709
  %v722 = vmul.f32 %v660, %v709
  %v723 = vmul.f32 %v661, %v709
  %v724 = vmul.f32 %v662, %v709
  %v725 = vmul.f32 %v663, %v709
  %v726 = vadd.f32 %v690, %v710
  %v727 = vadd.f32 %v691, %v711
  %v728 = vadd.f32 %v692, %v712
  %v729 = vadd.f32 %v693, %v713
  %v730 = vadd.f32 %v694, %v714
  %v731 = vadd.f32 %v695, %v715
  %v732 = vadd.f32 %v696, %v716
  %v733 = vadd.f32 %v697, %v717
  %v734 = vadd.f32 %v698, %v718
  %v735 = vadd.f32 %v699, %v719
  %v736 = vadd.f32 %v700, %v720
  %v737 = vadd.f32 %v701, %v721
  %v738 = vadd.f32 %v702, %v722
  %v739 = vadd.f32 %v703, %v723
  %v740 = vadd.f32 %v704, %v724
  %v741 = vadd.f32 %v705, %v725
  %v742 = vlaneseq
  %v743 = vshrl.u32 %v742, 7
  %v744 = vsub.s32 5, %v743
  %v745 = vrot.slane %v45, %v744
  %v746 = vmul.f32 %v650, %v745
  %v747 = vmul.f32 %v651, %v745
  %v748 = vmul.f32 %v652, %v745
  %v749 = vmul.f32 %v653, %v745
  %v750 = vmul.f32 %v654, %v745
  %v751 = vmul.f32 %v655, %v745
  %v752 = vmul.f32 %v656, %v745
  %v753 = vmul.f32 %v657, %v745
  %v754 = vmul.f32 %v658, %v745
  %v755 = vmul.f32 %v659, %v745
  %v756 = vmul.f32 %v660, %v745
  %v757 = vmul.f32 %v661, %v745
  %v758 = vmul.f32 %v662, %v745
  %v759 = vmul.f32 %v663, %v745
  %v760 = vmul.f32 %v664, %v745
  %v761 = vmul.f32 %v665, %v745
  %v762 = vadd.f32 %v726, %v746
  %v763 = vadd.f32 %v727, %v747
  %v764 = vadd.f32 %v728, %v748
  %v765 = vadd.f32 %v729, %v749
  %v766 = vadd.f32 %v730, %v750
  %v767 = vadd.f32 %v731, %v751
  %v768 = vadd.f32 %v732, %v752
  %v769 = vadd.f32 %v733, %v753
  %v770 = vadd.f32 %v734, %v754
  %v771 = vadd.f32 %v735, %v755
  %v772 = vadd.f32 %v736, %v756
  %v773 = vadd.f32 %v737, %v757
  %v774 = vadd.f32 %v738, %v758
  %v775 = vadd.f32 %v739, %v759
  %v776 = vadd.f32 %v740, %v760
  %v777 = vadd.f32 %v741, %v761
  %v778 = vlaneseq
  %v779 = vshrl.u32 %v778, 7
  %v780 = vsub.s32 2, %v779
  %v781 = vrot.slane %v46, %v780
  %v782 = vmul.f32 %v652, %v781
  %v783 = vmul.f32 %v653, %v781
  %v784 = vmul.f32 %v654, %v781
  %v785 = vmul.f32 %v655, %v781
  %v786 = vmul.f32 %v656, %v781
  %v787 = vmul.f32 %v657, %v781
  %v788 = vmul.f32 %v658, %v781
  %v789 = vmul.f32 %v659, %v781
  %v790 = vmul.f32 %v660, %v781
  %v791 = vmul.f32 %v661, %v781
  %v792 = vmul.f32 %v662, %v781
  %v793 = vmul.f32 %v663, %v781
  %v794 = vmul.f32 %v664, %v781
  %v795 = vmul.f32 %v665, %v781
  %v796 = vmul.f32 %v666, %v781
  %v797 = vmul.f32 %v667, %v781
  %v798 = vadd.f32 %v762, %v782
  %v799 = vadd.f32 %v763, %v783
  %v800 = vadd.f32 %v764, %v784
  %v801 = vadd.f32 %v765, %v785
  %v802 = vadd.f32 %v766, %v786
  %v803 = vadd.f32 %v767, %v787
  %v804 = vadd.f32 %v768, %v788
  %v805 = vadd.f32 %v769, %v789
  %v806 = vadd.f32 %v770, %v790
  %v807 = vadd.f32 %v771, %v791
  %v808 = vadd.f32 %v772, %v792
  %v809 = vadd.f32 %v773, %v793
  %v810 = vadd.f32 %v774, %v794
  %v811 = vadd.f32 %v775, %v795
  %v812 = vadd.f32 %v776, %v796
  %v813 = vadd.f32 %v777, %v797
  %v814 = vlaneseq
  %v815 = vshrl.u32 %v814, 7
  %v816 = vsub.s32 7, %v815
  %v817 = vrot.slane %v46, %v816
  %v818 = vmul.f32 %v654, %v817
  %v819 = vmul.f32 %v655, %v817
  %v820 = vmul.f32 %v656, %v817
  %v821 = vmul.f32 %v657, %v817
  %v822 = vmul.f32 %v658, %v817
  %v823 = vmul.f32 %v659, %v817
  %v824 = vmul.f32 %v660, %v817
  %v825 = vmul.f32 %v661, %v817
  %v826 = vmul.f32 %v662, %v817
  %v827 = vmul.f32 %v663, %v817
  %v828 = vmul.f32 %v664, %v817
  %v829 = vmul.f32 %v665, %v817
  %v830 = vmul.f32 %v666, %v817
  %v831 = vmul.f32 %v667, %v817
  %v832 = vmul.f32 %v668, %v817
  %v833 = vmul.f32 %v669, %v817
  %v834 = vadd.f32 %v798, %v818
  %v835 = vadd.f32 %v799, %v819
  %v836 = vadd.f32 %v800, %v820
  %v837 = vadd.f32 %v801, %v821
  %v838 = vadd.f32 %v802, %v822
  %v839 = vadd.f32 %v803, %v823
  %v840 = vadd.f32 %v804, %v824
  %v841 = vadd.f32 %v805, %v825
  %v842 = vadd.f32 %v806, %v826
  %v843 = vadd.f32 %v807, %v827
  %v844 = vadd.f32 %v808, %v828
  %v845 = vadd.f32 %v809, %v829
  %v846 = vadd.f32 %v810, %v830
  %v847 = vadd.f32 %v811, %v831
  %v848 = vadd.f32 %v812, %v832
  %v849 = vadd.f32 %v813, %v833
  %v850 = vld [vmem:[%s49 + $0x4] sm:$0xff]
  %v851 = vld [vmem:[%s49 + $0xc] sm:$0xff]
  %v852 = vld [vmem:[%s49 + $0x1c] sm:$0xff]
  %v853 = vld [vmem:[%s49 + $0x24] sm:$0xff]
  %v854 = vld [vmem:[%s49 + $0x34] sm:$0xff]
  %v855 = vld [vmem:[%s49 + $0x3c] sm:$0xff]
  %v856 = vld [vmem:[%s49 + $0x4c] sm:$0xff]
  %v857 = vld [vmem:[%s49 + $0x54] sm:$0xff]
  %v858 = vld [vmem:[%s49 + $0x64] sm:$0xff]
  %v859 = vld [vmem:[%s49 + $0x6c] sm:$0xff]
  %v860 = vld [vmem:[%s49 + $0x7c] sm:$0xff]
  %v861 = vld [vmem:[%s49 + $0x84] sm:$0xff]
  %v862 = vld [vmem:[%s49 + $0x94] sm:$0xff]
  %v863 = vld [vmem:[%s49 + $0x9c] sm:$0xff]
  %v864 = vld [vmem:[%s49 + $0xac] sm:$0xff]
  %v865 = vld [vmem:[%s49 + $0xb4] sm:$0xff]
  %v866 = vld [vmem:[%s49 + $0xc4] sm:$0xff]
  %v867 = vld [vmem:[%s49 + $0xcc] sm:$0xff]
  %v868 = vld [vmem:[%s49 + $0xdc] sm:$0xff]
  %v869 = vld [vmem:[%s49 + $0xe4] sm:$0xff]
  %v870 = vld [vmem:[%s49 + $0xf4] sm:$0xff]
  %v871 = vld [vmem:[%s49 + $0xfc] sm:$0xff]
  %v872 = vld [vmem:[%s49 + $0x10c] sm:$0xff]
  %v873 = vld [vmem:[%s49 + $0x114] sm:$0xff]
  %v874 = vlaneseq
  %v875 = vshrl.u32 %v874, 7
  %v876 = vsub.s32 4, %v875
  %v877 = vrot.slane %v44, %v876
  %v878 = vmul.f32 %v850, %v877
  %v879 = vmul.f32 %v851, %v877
  %v880 = vmul.f32 %v852, %v877
  %v881 = vmul.f32 %v853, %v877
  %v882 = vmul.f32 %v854, %v877
  %v883 = vmul.f32 %v855, %v877
  %v884 = vmul.f32 %v856, %v877
  %v885 = vmul.f32 %v857, %v877
  %v886 = vmul.f32 %v858, %v877
  %v887 = vmul.f32 %v859, %v877
  %v888 = vmul.f32 %v860, %v877
  %v889 = vmul.f32 %v861, %v877
  %v890 = vmul.f32 %v862, %v877
  %v891 = vmul.f32 %v863, %v877
  %v892 = vmul.f32 %v864, %v877
  %v893 = vmul.f32 %v865, %v877
  %v894 = vadd.f32 %v834, %v878
  %v895 = vadd.f32 %v835, %v879
  %v896 = vadd.f32 %v836, %v880
  %v897 = vadd.f32 %v837, %v881
  %v898 = vadd.f32 %v838, %v882
  %v899 = vadd.f32 %v839, %v883
  %v900 = vadd.f32 %v840, %v884
  %v901 = vadd.f32 %v841, %v885
  %v902 = vadd.f32 %v842, %v886
  %v903 = vadd.f32 %v843, %v887
  %v904 = vadd.f32 %v844, %v888
  %v905 = vadd.f32 %v845, %v889
  %v906 = vadd.f32 %v846, %v890
  %v907 = vadd.f32 %v847, %v891
  %v908 = vadd.f32 %v848, %v892
  %v909 = vadd.f32 %v849, %v893
  %v910 = vlaneseq
  %v911 = vshrl.u32 %v910, 7
  %v912 = vsub.s32 1, %v911
  %v913 = vrot.slane %v45, %v912
  %v914 = vmul.f32 %v852, %v913
  %v915 = vmul.f32 %v853, %v913
  %v916 = vmul.f32 %v854, %v913
  %v917 = vmul.f32 %v855, %v913
  %v918 = vmul.f32 %v856, %v913
  %v919 = vmul.f32 %v857, %v913
  %v920 = vmul.f32 %v858, %v913
  %v921 = vmul.f32 %v859, %v913
  %v922 = vmul.f32 %v860, %v913
  %v923 = vmul.f32 %v861, %v913
  %v924 = vmul.f32 %v862, %v913
  %v925 = vmul.f32 %v863, %v913
  %v926 = vmul.f32 %v864, %v913
  %v927 = vmul.f32 %v865, %v913
  %v928 = vmul.f32 %v866, %v913
  %v929 = vmul.f32 %v867, %v913
  %v930 = vadd.f32 %v894, %v914
  %v931 = vadd.f32 %v895, %v915
  %v932 = vadd.f32 %v896, %v916
  %v933 = vadd.f32 %v897, %v917
  %v934 = vadd.f32 %v898, %v918
  %v935 = vadd.f32 %v899, %v919
  %v936 = vadd.f32 %v900, %v920
  %v937 = vadd.f32 %v901, %v921
  %v938 = vadd.f32 %v902, %v922
  %v939 = vadd.f32 %v903, %v923
  %v940 = vadd.f32 %v904, %v924
  %v941 = vadd.f32 %v905, %v925
  %v942 = vadd.f32 %v906, %v926
  %v943 = vadd.f32 %v907, %v927
  %v944 = vadd.f32 %v908, %v928
  %v945 = vadd.f32 %v909, %v929
  %v946 = vlaneseq
  %v947 = vshrl.u32 %v946, 7
  %v948 = vsub.s32 6, %v947
  %v949 = vrot.slane %v45, %v948
  %v950 = vmul.f32 %v854, %v949
  %v951 = vmul.f32 %v855, %v949
  %v952 = vmul.f32 %v856, %v949
  %v953 = vmul.f32 %v857, %v949
  %v954 = vmul.f32 %v858, %v949
  %v955 = vmul.f32 %v859, %v949
  %v956 = vmul.f32 %v860, %v949
  %v957 = vmul.f32 %v861, %v949
  %v958 = vmul.f32 %v862, %v949
  %v959 = vmul.f32 %v863, %v949
  %v960 = vmul.f32 %v864, %v949
  %v961 = vmul.f32 %v865, %v949
  %v962 = vmul.f32 %v866, %v949
  %v963 = vmul.f32 %v867, %v949
  %v964 = vmul.f32 %v868, %v949
  %v965 = vmul.f32 %v869, %v949
  %v966 = vadd.f32 %v930, %v950
  %v967 = vadd.f32 %v931, %v951
  %v968 = vadd.f32 %v932, %v952
  %v969 = vadd.f32 %v933, %v953
  %v970 = vadd.f32 %v934, %v954
  %v971 = vadd.f32 %v935, %v955
  %v972 = vadd.f32 %v936, %v956
  %v973 = vadd.f32 %v937, %v957
  %v974 = vadd.f32 %v938, %v958
  %v975 = vadd.f32 %v939, %v959
  %v976 = vadd.f32 %v940, %v960
  %v977 = vadd.f32 %v941, %v961
  %v978 = vadd.f32 %v942, %v962
  %v979 = vadd.f32 %v943, %v963
  %v980 = vadd.f32 %v944, %v964
  %v981 = vadd.f32 %v945, %v965
  %v982 = vlaneseq
  %v983 = vshrl.u32 %v982, 7
  %v984 = vsub.s32 3, %v983
  %v985 = vrot.slane %v46, %v984
  %v986 = vmul.f32 %v856, %v985
  %v987 = vmul.f32 %v857, %v985
  %v988 = vmul.f32 %v858, %v985
  %v989 = vmul.f32 %v859, %v985
  %v990 = vmul.f32 %v860, %v985
  %v991 = vmul.f32 %v861, %v985
  %v992 = vmul.f32 %v862, %v985
  %v993 = vmul.f32 %v863, %v985
  %v994 = vmul.f32 %v864, %v985
  %v995 = vmul.f32 %v865, %v985
  %v996 = vmul.f32 %v866, %v985
  %v997 = vmul.f32 %v867, %v985
  %v998 = vmul.f32 %v868, %v985
  %v999 = vmul.f32 %v869, %v985
  %v1000 = vmul.f32 %v870, %v985
  %v1001 = vmul.f32 %v871, %v985
  %v1002 = vadd.f32 %v966, %v986
  %v1003 = vadd.f32 %v967, %v987
  %v1004 = vadd.f32 %v968, %v988
  %v1005 = vadd.f32 %v969, %v989
  %v1006 = vadd.f32 %v970, %v990
  %v1007 = vadd.f32 %v971, %v991
  %v1008 = vadd.f32 %v972, %v992
  %v1009 = vadd.f32 %v973, %v993
  %v1010 = vadd.f32 %v974, %v994
  %v1011 = vadd.f32 %v975, %v995
  %v1012 = vadd.f32 %v976, %v996
  %v1013 = vadd.f32 %v977, %v997
  %v1014 = vadd.f32 %v978, %v998
  %v1015 = vadd.f32 %v979, %v999
  %v1016 = vadd.f32 %v980, %v1000
  %v1017 = vadd.f32 %v981, %v1001
  %v1018 = vlaneseq
  %v1019 = vshrl.u32 %v1018, 7
  %v1020 = vsub.s32 0, %v1019
  %v1021 = vrot.slane %v47, %v1020
  %v1022 = vmul.f32 %v858, %v1021
  %v1023 = vmul.f32 %v859, %v1021
  %v1024 = vmul.f32 %v860, %v1021
  %v1025 = vmul.f32 %v861, %v1021
  %v1026 = vmul.f32 %v862, %v1021
  %v1027 = vmul.f32 %v863, %v1021
  %v1028 = vmul.f32 %v864, %v1021
  %v1029 = vmul.f32 %v865, %v1021
  %v1030 = vmul.f32 %v866, %v1021
  %v1031 = vmul.f32 %v867, %v1021
  %v1032 = vmul.f32 %v868, %v1021
  %v1033 = vmul.f32 %v869, %v1021
  %v1034 = vmul.f32 %v870, %v1021
  %v1035 = vmul.f32 %v871, %v1021
  %v1036 = vmul.f32 %v872, %v1021
  %v1037 = vmul.f32 %v873, %v1021
  %v1038 = vadd.f32 %v1002, %v1022
  %v1039 = vadd.f32 %v1003, %v1023
  %v1040 = vadd.f32 %v1004, %v1024
  %v1041 = vadd.f32 %v1005, %v1025
  %v1042 = vadd.f32 %v1006, %v1026
  %v1043 = vadd.f32 %v1007, %v1027
  %v1044 = vadd.f32 %v1008, %v1028
  %v1045 = vadd.f32 %v1009, %v1029
  %v1046 = vadd.f32 %v1010, %v1030
  %v1047 = vadd.f32 %v1011, %v1031
  %v1048 = vadd.f32 %v1012, %v1032
  %v1049 = vadd.f32 %v1013, %v1033
  %v1050 = vadd.f32 %v1014, %v1034
  %v1051 = vadd.f32 %v1015, %v1035
  %v1052 = vadd.f32 %v1016, %v1036
  %v1053 = vadd.f32 %v1017, %v1037
  %s1054 = smul.u32 0, 16
  %s1055 = scalar_lea.vmem %s3, %s1054
  %vm1056 = vcmask 64512
  %1057 = vst.msk [vmem:[%s1055] sm:$0xff] %vm1056, %v1038
  %1058 = vst.msk [vmem:[%s1055 + $0x8] sm:$0xff] %vm1056, %v1039
  %1059 = vst.msk [vmem:[%s1055 + $0x10] sm:$0xff] %vm1056, %v1040
  %1060 = vst.msk [vmem:[%s1055 + $0x18] sm:$0xff] %vm1056, %v1041
  %1061 = vst.msk [vmem:[%s1055 + $0x20] sm:$0xff] %vm1056, %v1042
  %1062 = vst.msk [vmem:[%s1055 + $0x28] sm:$0xff] %vm1056, %v1043
  %1063 = vst.msk [vmem:[%s1055 + $0x30] sm:$0xff] %vm1056, %v1044
  %1064 = vst.msk [vmem:[%s1055 + $0x38] sm:$0xff] %vm1056, %v1045
  %1065 = vst.msk [vmem:[%s1055 + $0x40] sm:$0xff] %vm1056, %v1046
  %1066 = vst.msk [vmem:[%s1055 + $0x48] sm:$0xff] %vm1056, %v1047
  %1067 = vst.msk [vmem:[%s1055 + $0x50] sm:$0xff] %vm1056, %v1048
  %1068 = vst.msk [vmem:[%s1055 + $0x58] sm:$0xff] %vm1056, %v1049
  %1069 = vst.msk [vmem:[%s1055 + $0x60] sm:$0xff] %vm1056, %v1050
  %1070 = vst.msk [vmem:[%s1055 + $0x68] sm:$0xff] %vm1056, %v1051
  %1071 = vst.msk [vmem:[%s1055 + $0x70] sm:$0xff] %vm1056, %v1052
  %1072 = vst.msk [vmem:[%s1055 + $0x78] sm:$0xff] %vm1056, %v1053
  %s1073 = scalar_lea.vmem %s0, 192
  %v1074 = vld [vmem:[%s1073] sm:$0xff]
  %v1075 = vld [vmem:[%s1073 + $0x8] sm:$0xff]
  %v1076 = vld [vmem:[%s1073 + $0x18] sm:$0xff]
  %v1077 = vld [vmem:[%s1073 + $0x20] sm:$0xff]
  %v1078 = vld [vmem:[%s1073 + $0x30] sm:$0xff]
  %v1079 = vld [vmem:[%s1073 + $0x38] sm:$0xff]
  %v1080 = vld [vmem:[%s1073 + $0x48] sm:$0xff]
  %v1081 = vld [vmem:[%s1073 + $0x50] sm:$0xff]
  %v1082 = vld [vmem:[%s1073 + $0x60] sm:$0xff]
  %v1083 = vld [vmem:[%s1073 + $0x68] sm:$0xff]
  %v1084 = vld [vmem:[%s1073 + $0x78] sm:$0xff]
  %v1085 = vld [vmem:[%s1073 + $0x80] sm:$0xff]
  %v1086 = vld [vmem:[%s1073 + $0x90] sm:$0xff]
  %v1087 = vld [vmem:[%s1073 + $0x98] sm:$0xff]
  %v1088 = vld [vmem:[%s1073 + $0xa8] sm:$0xff]
  %v1089 = vld [vmem:[%s1073 + $0xb0] sm:$0xff]
  %v1090 = vld [vmem:[%s40] sm:$0xff]
  %v1091 = vld [vmem:[%s40 + $0x8] sm:$0xff]
  %v1092 = vld [vmem:[%s40 + $0x18] sm:$0xff]
  %v1093 = vld [vmem:[%s40 + $0x20] sm:$0xff]
  %v1094 = vld [vmem:[%s40 + $0x30] sm:$0xff]
  %v1095 = vld [vmem:[%s40 + $0x38] sm:$0xff]
  %v1096 = vld [vmem:[%s40 + $0x48] sm:$0xff]
  %v1097 = vld [vmem:[%s40 + $0x50] sm:$0xff]
  %v1098 = vmul.f32 %v1074, %v77
  %v1099 = vmul.f32 %v1075, %v77
  %v1100 = vmul.f32 %v1076, %v77
  %v1101 = vmul.f32 %v1077, %v77
  %v1102 = vmul.f32 %v1078, %v77
  %v1103 = vmul.f32 %v1079, %v77
  %v1104 = vmul.f32 %v1080, %v77
  %v1105 = vmul.f32 %v1081, %v77
  %v1106 = vmul.f32 %v1082, %v77
  %v1107 = vmul.f32 %v1083, %v77
  %v1108 = vmul.f32 %v1084, %v77
  %v1109 = vmul.f32 %v1085, %v77
  %v1110 = vmul.f32 %v1086, %v77
  %v1111 = vmul.f32 %v1087, %v77
  %v1112 = vmul.f32 %v1088, %v77
  %v1113 = vmul.f32 %v1089, %v77
  %v1114 = vmul.f32 %v1076, %v97
  %v1115 = vmul.f32 %v1077, %v97
  %v1116 = vmul.f32 %v1078, %v97
  %v1117 = vmul.f32 %v1079, %v97
  %v1118 = vmul.f32 %v1080, %v97
  %v1119 = vmul.f32 %v1081, %v97
  %v1120 = vmul.f32 %v1082, %v97
  %v1121 = vmul.f32 %v1083, %v97
  %v1122 = vmul.f32 %v1084, %v97
  %v1123 = vmul.f32 %v1085, %v97
  %v1124 = vmul.f32 %v1086, %v97
  %v1125 = vmul.f32 %v1087, %v97
  %v1126 = vmul.f32 %v1088, %v97
  %v1127 = vmul.f32 %v1089, %v97
  %v1128 = vmul.f32 %v1090, %v97
  %v1129 = vmul.f32 %v1091, %v97
  %v1130 = vadd.f32 %v1098, %v1114
  %v1131 = vadd.f32 %v1099, %v1115
  %v1132 = vadd.f32 %v1100, %v1116
  %v1133 = vadd.f32 %v1101, %v1117
  %v1134 = vadd.f32 %v1102, %v1118
  %v1135 = vadd.f32 %v1103, %v1119
  %v1136 = vadd.f32 %v1104, %v1120
  %v1137 = vadd.f32 %v1105, %v1121
  %v1138 = vadd.f32 %v1106, %v1122
  %v1139 = vadd.f32 %v1107, %v1123
  %v1140 = vadd.f32 %v1108, %v1124
  %v1141 = vadd.f32 %v1109, %v1125
  %v1142 = vadd.f32 %v1110, %v1126
  %v1143 = vadd.f32 %v1111, %v1127
  %v1144 = vadd.f32 %v1112, %v1128
  %v1145 = vadd.f32 %v1113, %v1129
  %v1146 = vmul.f32 %v1078, %v133
  %v1147 = vmul.f32 %v1079, %v133
  %v1148 = vmul.f32 %v1080, %v133
  %v1149 = vmul.f32 %v1081, %v133
  %v1150 = vmul.f32 %v1082, %v133
  %v1151 = vmul.f32 %v1083, %v133
  %v1152 = vmul.f32 %v1084, %v133
  %v1153 = vmul.f32 %v1085, %v133
  %v1154 = vmul.f32 %v1086, %v133
  %v1155 = vmul.f32 %v1087, %v133
  %v1156 = vmul.f32 %v1088, %v133
  %v1157 = vmul.f32 %v1089, %v133
  %v1158 = vmul.f32 %v1090, %v133
  %v1159 = vmul.f32 %v1091, %v133
  %v1160 = vmul.f32 %v1092, %v133
  %v1161 = vmul.f32 %v1093, %v133
  %v1162 = vadd.f32 %v1130, %v1146
  %v1163 = vadd.f32 %v1131, %v1147
  %v1164 = vadd.f32 %v1132, %v1148
  %v1165 = vadd.f32 %v1133, %v1149
  %v1166 = vadd.f32 %v1134, %v1150
  %v1167 = vadd.f32 %v1135, %v1151
  %v1168 = vadd.f32 %v1136, %v1152
  %v1169 = vadd.f32 %v1137, %v1153
  %v1170 = vadd.f32 %v1138, %v1154
  %v1171 = vadd.f32 %v1139, %v1155
  %v1172 = vadd.f32 %v1140, %v1156
  %v1173 = vadd.f32 %v1141, %v1157
  %v1174 = vadd.f32 %v1142, %v1158
  %v1175 = vadd.f32 %v1143, %v1159
  %v1176 = vadd.f32 %v1144, %v1160
  %v1177 = vadd.f32 %v1145, %v1161
  %v1178 = vmul.f32 %v1080, %v169
  %v1179 = vmul.f32 %v1081, %v169
  %v1180 = vmul.f32 %v1082, %v169
  %v1181 = vmul.f32 %v1083, %v169
  %v1182 = vmul.f32 %v1084, %v169
  %v1183 = vmul.f32 %v1085, %v169
  %v1184 = vmul.f32 %v1086, %v169
  %v1185 = vmul.f32 %v1087, %v169
  %v1186 = vmul.f32 %v1088, %v169
  %v1187 = vmul.f32 %v1089, %v169
  %v1188 = vmul.f32 %v1090, %v169
  %v1189 = vmul.f32 %v1091, %v169
  %v1190 = vmul.f32 %v1092, %v169
  %v1191 = vmul.f32 %v1093, %v169
  %v1192 = vmul.f32 %v1094, %v169
  %v1193 = vmul.f32 %v1095, %v169
  %v1194 = vadd.f32 %v1162, %v1178
  %v1195 = vadd.f32 %v1163, %v1179
  %v1196 = vadd.f32 %v1164, %v1180
  %v1197 = vadd.f32 %v1165, %v1181
  %v1198 = vadd.f32 %v1166, %v1182
  %v1199 = vadd.f32 %v1167, %v1183
  %v1200 = vadd.f32 %v1168, %v1184
  %v1201 = vadd.f32 %v1169, %v1185
  %v1202 = vadd.f32 %v1170, %v1186
  %v1203 = vadd.f32 %v1171, %v1187
  %v1204 = vadd.f32 %v1172, %v1188
  %v1205 = vadd.f32 %v1173, %v1189
  %v1206 = vadd.f32 %v1174, %v1190
  %v1207 = vadd.f32 %v1175, %v1191
  %v1208 = vadd.f32 %v1176, %v1192
  %v1209 = vadd.f32 %v1177, %v1193
  %v1210 = vmul.f32 %v1082, %v205
  %v1211 = vmul.f32 %v1083, %v205
  %v1212 = vmul.f32 %v1084, %v205
  %v1213 = vmul.f32 %v1085, %v205
  %v1214 = vmul.f32 %v1086, %v205
  %v1215 = vmul.f32 %v1087, %v205
  %v1216 = vmul.f32 %v1088, %v205
  %v1217 = vmul.f32 %v1089, %v205
  %v1218 = vmul.f32 %v1090, %v205
  %v1219 = vmul.f32 %v1091, %v205
  %v1220 = vmul.f32 %v1092, %v205
  %v1221 = vmul.f32 %v1093, %v205
  %v1222 = vmul.f32 %v1094, %v205
  %v1223 = vmul.f32 %v1095, %v205
  %v1224 = vmul.f32 %v1096, %v205
  %v1225 = vmul.f32 %v1097, %v205
  %v1226 = vadd.f32 %v1194, %v1210
  %v1227 = vadd.f32 %v1195, %v1211
  %v1228 = vadd.f32 %v1196, %v1212
  %v1229 = vadd.f32 %v1197, %v1213
  %v1230 = vadd.f32 %v1198, %v1214
  %v1231 = vadd.f32 %v1199, %v1215
  %v1232 = vadd.f32 %v1200, %v1216
  %v1233 = vadd.f32 %v1201, %v1217
  %v1234 = vadd.f32 %v1202, %v1218
  %v1235 = vadd.f32 %v1203, %v1219
  %v1236 = vadd.f32 %v1204, %v1220
  %v1237 = vadd.f32 %v1205, %v1221
  %v1238 = vadd.f32 %v1206, %v1222
  %v1239 = vadd.f32 %v1207, %v1223
  %v1240 = vadd.f32 %v1208, %v1224
  %v1241 = vadd.f32 %v1209, %v1225
  %v1242 = vld [vmem:[%s1073 + $0x1] sm:$0xff]
  %v1243 = vld [vmem:[%s1073 + $0x9] sm:$0xff]
  %v1244 = vld [vmem:[%s1073 + $0x19] sm:$0xff]
  %v1245 = vld [vmem:[%s1073 + $0x21] sm:$0xff]
  %v1246 = vld [vmem:[%s1073 + $0x31] sm:$0xff]
  %v1247 = vld [vmem:[%s1073 + $0x39] sm:$0xff]
  %v1248 = vld [vmem:[%s1073 + $0x49] sm:$0xff]
  %v1249 = vld [vmem:[%s1073 + $0x51] sm:$0xff]
  %v1250 = vld [vmem:[%s1073 + $0x61] sm:$0xff]
  %v1251 = vld [vmem:[%s1073 + $0x69] sm:$0xff]
  %v1252 = vld [vmem:[%s1073 + $0x79] sm:$0xff]
  %v1253 = vld [vmem:[%s1073 + $0x81] sm:$0xff]
  %v1254 = vld [vmem:[%s1073 + $0x91] sm:$0xff]
  %v1255 = vld [vmem:[%s1073 + $0x99] sm:$0xff]
  %v1256 = vld [vmem:[%s1073 + $0xa9] sm:$0xff]
  %v1257 = vld [vmem:[%s1073 + $0xb1] sm:$0xff]
  %v1258 = vld [vmem:[%s40 + $0x1] sm:$0xff]
  %v1259 = vld [vmem:[%s40 + $0x9] sm:$0xff]
  %v1260 = vld [vmem:[%s40 + $0x19] sm:$0xff]
  %v1261 = vld [vmem:[%s40 + $0x21] sm:$0xff]
  %v1262 = vld [vmem:[%s40 + $0x31] sm:$0xff]
  %v1263 = vld [vmem:[%s40 + $0x39] sm:$0xff]
  %v1264 = vld [vmem:[%s40 + $0x49] sm:$0xff]
  %v1265 = vld [vmem:[%s40 + $0x51] sm:$0xff]
  %v1266 = vmul.f32 %v1242, %v265
  %v1267 = vmul.f32 %v1243, %v265
  %v1268 = vmul.f32 %v1244, %v265
  %v1269 = vmul.f32 %v1245, %v265
  %v1270 = vmul.f32 %v1246, %v265
  %v1271 = vmul.f32 %v1247, %v265
  %v1272 = vmul.f32 %v1248, %v265
  %v1273 = vmul.f32 %v1249, %v265
  %v1274 = vmul.f32 %v1250, %v265
  %v1275 = vmul.f32 %v1251, %v265
  %v1276 = vmul.f32 %v1252, %v265
  %v1277 = vmul.f32 %v1253, %v265
  %v1278 = vmul.f32 %v1254, %v265
  %v1279 = vmul.f32 %v1255, %v265
  %v1280 = vmul.f32 %v1256, %v265
  %v1281 = vmul.f32 %v1257, %v265
  %v1282 = vadd.f32 %v1226, %v1266
  %v1283 = vadd.f32 %v1227, %v1267
  %v1284 = vadd.f32 %v1228, %v1268
  %v1285 = vadd.f32 %v1229, %v1269
  %v1286 = vadd.f32 %v1230, %v1270
  %v1287 = vadd.f32 %v1231, %v1271
  %v1288 = vadd.f32 %v1232, %v1272
  %v1289 = vadd.f32 %v1233, %v1273
  %v1290 = vadd.f32 %v1234, %v1274
  %v1291 = vadd.f32 %v1235, %v1275
  %v1292 = vadd.f32 %v1236, %v1276
  %v1293 = vadd.f32 %v1237, %v1277
  %v1294 = vadd.f32 %v1238, %v1278
  %v1295 = vadd.f32 %v1239, %v1279
  %v1296 = vadd.f32 %v1240, %v1280
  %v1297 = vadd.f32 %v1241, %v1281
  %v1298 = vmul.f32 %v1244, %v301
  %v1299 = vmul.f32 %v1245, %v301
  %v1300 = vmul.f32 %v1246, %v301
  %v1301 = vmul.f32 %v1247, %v301
  %v1302 = vmul.f32 %v1248, %v301
  %v1303 = vmul.f32 %v1249, %v301
  %v1304 = vmul.f32 %v1250, %v301
  %v1305 = vmul.f32 %v1251, %v301
  %v1306 = vmul.f32 %v1252, %v301
  %v1307 = vmul.f32 %v1253, %v301
  %v1308 = vmul.f32 %v1254, %v301
  %v1309 = vmul.f32 %v1255, %v301
  %v1310 = vmul.f32 %v1256, %v301
  %v1311 = vmul.f32 %v1257, %v301
  %v1312 = vmul.f32 %v1258, %v301
  %v1313 = vmul.f32 %v1259, %v301
  %v1314 = vadd.f32 %v1282, %v1298
  %v1315 = vadd.f32 %v1283, %v1299
  %v1316 = vadd.f32 %v1284, %v1300
  %v1317 = vadd.f32 %v1285, %v1301
  %v1318 = vadd.f32 %v1286, %v1302
  %v1319 = vadd.f32 %v1287, %v1303
  %v1320 = vadd.f32 %v1288, %v1304
  %v1321 = vadd.f32 %v1289, %v1305
  %v1322 = vadd.f32 %v1290, %v1306
  %v1323 = vadd.f32 %v1291, %v1307
  %v1324 = vadd.f32 %v1292, %v1308
  %v1325 = vadd.f32 %v1293, %v1309
  %v1326 = vadd.f32 %v1294, %v1310
  %v1327 = vadd.f32 %v1295, %v1311
  %v1328 = vadd.f32 %v1296, %v1312
  %v1329 = vadd.f32 %v1297, %v1313
  %v1330 = vmul.f32 %v1246, %v337
  %v1331 = vmul.f32 %v1247, %v337
  %v1332 = vmul.f32 %v1248, %v337
  %v1333 = vmul.f32 %v1249, %v337
  %v1334 = vmul.f32 %v1250, %v337
  %v1335 = vmul.f32 %v1251, %v337
  %v1336 = vmul.f32 %v1252, %v337
  %v1337 = vmul.f32 %v1253, %v337
  %v1338 = vmul.f32 %v1254, %v337
  %v1339 = vmul.f32 %v1255, %v337
  %v1340 = vmul.f32 %v1256, %v337
  %v1341 = vmul.f32 %v1257, %v337
  %v1342 = vmul.f32 %v1258, %v337
  %v1343 = vmul.f32 %v1259, %v337
  %v1344 = vmul.f32 %v1260, %v337
  %v1345 = vmul.f32 %v1261, %v337
  %v1346 = vadd.f32 %v1314, %v1330
  %v1347 = vadd.f32 %v1315, %v1331
  %v1348 = vadd.f32 %v1316, %v1332
  %v1349 = vadd.f32 %v1317, %v1333
  %v1350 = vadd.f32 %v1318, %v1334
  %v1351 = vadd.f32 %v1319, %v1335
  %v1352 = vadd.f32 %v1320, %v1336
  %v1353 = vadd.f32 %v1321, %v1337
  %v1354 = vadd.f32 %v1322, %v1338
  %v1355 = vadd.f32 %v1323, %v1339
  %v1356 = vadd.f32 %v1324, %v1340
  %v1357 = vadd.f32 %v1325, %v1341
  %v1358 = vadd.f32 %v1326, %v1342
  %v1359 = vadd.f32 %v1327, %v1343
  %v1360 = vadd.f32 %v1328, %v1344
  %v1361 = vadd.f32 %v1329, %v1345
  %v1362 = vmul.f32 %v1248, %v373
  %v1363 = vmul.f32 %v1249, %v373
  %v1364 = vmul.f32 %v1250, %v373
  %v1365 = vmul.f32 %v1251, %v373
  %v1366 = vmul.f32 %v1252, %v373
  %v1367 = vmul.f32 %v1253, %v373
  %v1368 = vmul.f32 %v1254, %v373
  %v1369 = vmul.f32 %v1255, %v373
  %v1370 = vmul.f32 %v1256, %v373
  %v1371 = vmul.f32 %v1257, %v373
  %v1372 = vmul.f32 %v1258, %v373
  %v1373 = vmul.f32 %v1259, %v373
  %v1374 = vmul.f32 %v1260, %v373
  %v1375 = vmul.f32 %v1261, %v373
  %v1376 = vmul.f32 %v1262, %v373
  %v1377 = vmul.f32 %v1263, %v373
  %v1378 = vadd.f32 %v1346, %v1362
  %v1379 = vadd.f32 %v1347, %v1363
  %v1380 = vadd.f32 %v1348, %v1364
  %v1381 = vadd.f32 %v1349, %v1365
  %v1382 = vadd.f32 %v1350, %v1366
  %v1383 = vadd.f32 %v1351, %v1367
  %v1384 = vadd.f32 %v1352, %v1368
  %v1385 = vadd.f32 %v1353, %v1369
  %v1386 = vadd.f32 %v1354, %v1370
  %v1387 = vadd.f32 %v1355, %v1371
  %v1388 = vadd.f32 %v1356, %v1372
  %v1389 = vadd.f32 %v1357, %v1373
  %v1390 = vadd.f32 %v1358, %v1374
  %v1391 = vadd.f32 %v1359, %v1375
  %v1392 = vadd.f32 %v1360, %v1376
  %v1393 = vadd.f32 %v1361, %v1377
  %v1394 = vmul.f32 %v1250, %v409
  %v1395 = vmul.f32 %v1251, %v409
  %v1396 = vmul.f32 %v1252, %v409
  %v1397 = vmul.f32 %v1253, %v409
  %v1398 = vmul.f32 %v1254, %v409
  %v1399 = vmul.f32 %v1255, %v409
  %v1400 = vmul.f32 %v1256, %v409
  %v1401 = vmul.f32 %v1257, %v409
  %v1402 = vmul.f32 %v1258, %v409
  %v1403 = vmul.f32 %v1259, %v409
  %v1404 = vmul.f32 %v1260, %v409
  %v1405 = vmul.f32 %v1261, %v409
  %v1406 = vmul.f32 %v1262, %v409
  %v1407 = vmul.f32 %v1263, %v409
  %v1408 = vmul.f32 %v1264, %v409
  %v1409 = vmul.f32 %v1265, %v409
  %v1410 = vadd.f32 %v1378, %v1394
  %v1411 = vadd.f32 %v1379, %v1395
  %v1412 = vadd.f32 %v1380, %v1396
  %v1413 = vadd.f32 %v1381, %v1397
  %v1414 = vadd.f32 %v1382, %v1398
  %v1415 = vadd.f32 %v1383, %v1399
  %v1416 = vadd.f32 %v1384, %v1400
  %v1417 = vadd.f32 %v1385, %v1401
  %v1418 = vadd.f32 %v1386, %v1402
  %v1419 = vadd.f32 %v1387, %v1403
  %v1420 = vadd.f32 %v1388, %v1404
  %v1421 = vadd.f32 %v1389, %v1405
  %v1422 = vadd.f32 %v1390, %v1406
  %v1423 = vadd.f32 %v1391, %v1407
  %v1424 = vadd.f32 %v1392, %v1408
  %v1425 = vadd.f32 %v1393, %v1409
  %v1426 = vld [vmem:[%s1073 + $0x2] sm:$0xff]
  %v1427 = vld [vmem:[%s1073 + $0xa] sm:$0xff]
  %v1428 = vld [vmem:[%s1073 + $0x1a] sm:$0xff]
  %v1429 = vld [vmem:[%s1073 + $0x22] sm:$0xff]
  %v1430 = vld [vmem:[%s1073 + $0x32] sm:$0xff]
  %v1431 = vld [vmem:[%s1073 + $0x3a] sm:$0xff]
  %v1432 = vld [vmem:[%s1073 + $0x4a] sm:$0xff]
  %v1433 = vld [vmem:[%s1073 + $0x52] sm:$0xff]
  %v1434 = vld [vmem:[%s1073 + $0x62] sm:$0xff]
  %v1435 = vld [vmem:[%s1073 + $0x6a] sm:$0xff]
  %v1436 = vld [vmem:[%s1073 + $0x7a] sm:$0xff]
  %v1437 = vld [vmem:[%s1073 + $0x82] sm:$0xff]
  %v1438 = vld [vmem:[%s1073 + $0x92] sm:$0xff]
  %v1439 = vld [vmem:[%s1073 + $0x9a] sm:$0xff]
  %v1440 = vld [vmem:[%s1073 + $0xaa] sm:$0xff]
  %v1441 = vld [vmem:[%s1073 + $0xb2] sm:$0xff]
  %v1442 = vld [vmem:[%s40 + $0x2] sm:$0xff]
  %v1443 = vld [vmem:[%s40 + $0xa] sm:$0xff]
  %v1444 = vld [vmem:[%s40 + $0x1a] sm:$0xff]
  %v1445 = vld [vmem:[%s40 + $0x22] sm:$0xff]
  %v1446 = vld [vmem:[%s40 + $0x32] sm:$0xff]
  %v1447 = vld [vmem:[%s40 + $0x3a] sm:$0xff]
  %v1448 = vld [vmem:[%s40 + $0x4a] sm:$0xff]
  %v1449 = vld [vmem:[%s40 + $0x52] sm:$0xff]
  %v1450 = vmul.f32 %v1426, %v469
  %v1451 = vmul.f32 %v1427, %v469
  %v1452 = vmul.f32 %v1428, %v469
  %v1453 = vmul.f32 %v1429, %v469
  %v1454 = vmul.f32 %v1430, %v469
  %v1455 = vmul.f32 %v1431, %v469
  %v1456 = vmul.f32 %v1432, %v469
  %v1457 = vmul.f32 %v1433, %v469
  %v1458 = vmul.f32 %v1434, %v469
  %v1459 = vmul.f32 %v1435, %v469
  %v1460 = vmul.f32 %v1436, %v469
  %v1461 = vmul.f32 %v1437, %v469
  %v1462 = vmul.f32 %v1438, %v469
  %v1463 = vmul.f32 %v1439, %v469
  %v1464 = vmul.f32 %v1440, %v469
  %v1465 = vmul.f32 %v1441, %v469
  %v1466 = vadd.f32 %v1410, %v1450
  %v1467 = vadd.f32 %v1411, %v1451
  %v1468 = vadd.f32 %v1412, %v1452
  %v1469 = vadd.f32 %v1413, %v1453
  %v1470 = vadd.f32 %v1414, %v1454
  %v1471 = vadd.f32 %v1415, %v1455
  %v1472 = vadd.f32 %v1416, %v1456
  %v1473 = vadd.f32 %v1417, %v1457
  %v1474 = vadd.f32 %v1418, %v1458
  %v1475 = vadd.f32 %v1419, %v1459
  %v1476 = vadd.f32 %v1420, %v1460
  %v1477 = vadd.f32 %v1421, %v1461
  %v1478 = vadd.f32 %v1422, %v1462
  %v1479 = vadd.f32 %v1423, %v1463
  %v1480 = vadd.f32 %v1424, %v1464
  %v1481 = vadd.f32 %v1425, %v1465
  %v1482 = vmul.f32 %v1428, %v505
  %v1483 = vmul.f32 %v1429, %v505
  %v1484 = vmul.f32 %v1430, %v505
  %v1485 = vmul.f32 %v1431, %v505
  %v1486 = vmul.f32 %v1432, %v505
  %v1487 = vmul.f32 %v1433, %v505
  %v1488 = vmul.f32 %v1434, %v505
  %v1489 = vmul.f32 %v1435, %v505
  %v1490 = vmul.f32 %v1436, %v505
  %v1491 = vmul.f32 %v1437, %v505
  %v1492 = vmul.f32 %v1438, %v505
  %v1493 = vmul.f32 %v1439, %v505
  %v1494 = vmul.f32 %v1440, %v505
  %v1495 = vmul.f32 %v1441, %v505
  %v1496 = vmul.f32 %v1442, %v505
  %v1497 = vmul.f32 %v1443, %v505
  %v1498 = vadd.f32 %v1466, %v1482
  %v1499 = vadd.f32 %v1467, %v1483
  %v1500 = vadd.f32 %v1468, %v1484
  %v1501 = vadd.f32 %v1469, %v1485
  %v1502 = vadd.f32 %v1470, %v1486
  %v1503 = vadd.f32 %v1471, %v1487
  %v1504 = vadd.f32 %v1472, %v1488
  %v1505 = vadd.f32 %v1473, %v1489
  %v1506 = vadd.f32 %v1474, %v1490
  %v1507 = vadd.f32 %v1475, %v1491
  %v1508 = vadd.f32 %v1476, %v1492
  %v1509 = vadd.f32 %v1477, %v1493
  %v1510 = vadd.f32 %v1478, %v1494
  %v1511 = vadd.f32 %v1479, %v1495
  %v1512 = vadd.f32 %v1480, %v1496
  %v1513 = vadd.f32 %v1481, %v1497
  %v1514 = vmul.f32 %v1430, %v541
  %v1515 = vmul.f32 %v1431, %v541
  %v1516 = vmul.f32 %v1432, %v541
  %v1517 = vmul.f32 %v1433, %v541
  %v1518 = vmul.f32 %v1434, %v541
  %v1519 = vmul.f32 %v1435, %v541
  %v1520 = vmul.f32 %v1436, %v541
  %v1521 = vmul.f32 %v1437, %v541
  %v1522 = vmul.f32 %v1438, %v541
  %v1523 = vmul.f32 %v1439, %v541
  %v1524 = vmul.f32 %v1440, %v541
  %v1525 = vmul.f32 %v1441, %v541
  %v1526 = vmul.f32 %v1442, %v541
  %v1527 = vmul.f32 %v1443, %v541
  %v1528 = vmul.f32 %v1444, %v541
  %v1529 = vmul.f32 %v1445, %v541
  %v1530 = vadd.f32 %v1498, %v1514
  %v1531 = vadd.f32 %v1499, %v1515
  %v1532 = vadd.f32 %v1500, %v1516
  %v1533 = vadd.f32 %v1501, %v1517
  %v1534 = vadd.f32 %v1502, %v1518
  %v1535 = vadd.f32 %v1503, %v1519
  %v1536 = vadd.f32 %v1504, %v1520
  %v1537 = vadd.f32 %v1505, %v1521
  %v1538 = vadd.f32 %v1506, %v1522
  %v1539 = vadd.f32 %v1507, %v1523
  %v1540 = vadd.f32 %v1508, %v1524
  %v1541 = vadd.f32 %v1509, %v1525
  %v1542 = vadd.f32 %v1510, %v1526
  %v1543 = vadd.f32 %v1511, %v1527
  %v1544 = vadd.f32 %v1512, %v1528
  %v1545 = vadd.f32 %v1513, %v1529
  %v1546 = vmul.f32 %v1432, %v577
  %v1547 = vmul.f32 %v1433, %v577
  %v1548 = vmul.f32 %v1434, %v577
  %v1549 = vmul.f32 %v1435, %v577
  %v1550 = vmul.f32 %v1436, %v577
  %v1551 = vmul.f32 %v1437, %v577
  %v1552 = vmul.f32 %v1438, %v577
  %v1553 = vmul.f32 %v1439, %v577
  %v1554 = vmul.f32 %v1440, %v577
  %v1555 = vmul.f32 %v1441, %v577
  %v1556 = vmul.f32 %v1442, %v577
  %v1557 = vmul.f32 %v1443, %v577
  %v1558 = vmul.f32 %v1444, %v577
  %v1559 = vmul.f32 %v1445, %v577
  %v1560 = vmul.f32 %v1446, %v577
  %v1561 = vmul.f32 %v1447, %v577
  %v1562 = vadd.f32 %v1530, %v1546
  %v1563 = vadd.f32 %v1531, %v1547
  %v1564 = vadd.f32 %v1532, %v1548
  %v1565 = vadd.f32 %v1533, %v1549
  %v1566 = vadd.f32 %v1534, %v1550
  %v1567 = vadd.f32 %v1535, %v1551
  %v1568 = vadd.f32 %v1536, %v1552
  %v1569 = vadd.f32 %v1537, %v1553
  %v1570 = vadd.f32 %v1538, %v1554
  %v1571 = vadd.f32 %v1539, %v1555
  %v1572 = vadd.f32 %v1540, %v1556
  %v1573 = vadd.f32 %v1541, %v1557
  %v1574 = vadd.f32 %v1542, %v1558
  %v1575 = vadd.f32 %v1543, %v1559
  %v1576 = vadd.f32 %v1544, %v1560
  %v1577 = vadd.f32 %v1545, %v1561
  %v1578 = vmul.f32 %v1434, %v613
  %v1579 = vmul.f32 %v1435, %v613
  %v1580 = vmul.f32 %v1436, %v613
  %v1581 = vmul.f32 %v1437, %v613
  %v1582 = vmul.f32 %v1438, %v613
  %v1583 = vmul.f32 %v1439, %v613
  %v1584 = vmul.f32 %v1440, %v613
  %v1585 = vmul.f32 %v1441, %v613
  %v1586 = vmul.f32 %v1442, %v613
  %v1587 = vmul.f32 %v1443, %v613
  %v1588 = vmul.f32 %v1444, %v613
  %v1589 = vmul.f32 %v1445, %v613
  %v1590 = vmul.f32 %v1446, %v613
  %v1591 = vmul.f32 %v1447, %v613
  %v1592 = vmul.f32 %v1448, %v613
  %v1593 = vmul.f32 %v1449, %v613
  %v1594 = vadd.f32 %v1562, %v1578
  %v1595 = vadd.f32 %v1563, %v1579
  %v1596 = vadd.f32 %v1564, %v1580
  %v1597 = vadd.f32 %v1565, %v1581
  %v1598 = vadd.f32 %v1566, %v1582
  %v1599 = vadd.f32 %v1567, %v1583
  %v1600 = vadd.f32 %v1568, %v1584
  %v1601 = vadd.f32 %v1569, %v1585
  %v1602 = vadd.f32 %v1570, %v1586
  %v1603 = vadd.f32 %v1571, %v1587
  %v1604 = vadd.f32 %v1572, %v1588
  %v1605 = vadd.f32 %v1573, %v1589
  %v1606 = vadd.f32 %v1574, %v1590
  %v1607 = vadd.f32 %v1575, %v1591
  %v1608 = vadd.f32 %v1576, %v1592
  %v1609 = vadd.f32 %v1577, %v1593
  %v1610 = vld [vmem:[%s1073 + $0x3] sm:$0xff]
  %v1611 = vld [vmem:[%s1073 + $0xb] sm:$0xff]
  %v1612 = vld [vmem:[%s1073 + $0x1b] sm:$0xff]
  %v1613 = vld [vmem:[%s1073 + $0x23] sm:$0xff]
  %v1614 = vld [vmem:[%s1073 + $0x33] sm:$0xff]
  %v1615 = vld [vmem:[%s1073 + $0x3b] sm:$0xff]
  %v1616 = vld [vmem:[%s1073 + $0x4b] sm:$0xff]
  %v1617 = vld [vmem:[%s1073 + $0x53] sm:$0xff]
  %v1618 = vld [vmem:[%s1073 + $0x63] sm:$0xff]
  %v1619 = vld [vmem:[%s1073 + $0x6b] sm:$0xff]
  %v1620 = vld [vmem:[%s1073 + $0x7b] sm:$0xff]
  %v1621 = vld [vmem:[%s1073 + $0x83] sm:$0xff]
  %v1622 = vld [vmem:[%s1073 + $0x93] sm:$0xff]
  %v1623 = vld [vmem:[%s1073 + $0x9b] sm:$0xff]
  %v1624 = vld [vmem:[%s1073 + $0xab] sm:$0xff]
  %v1625 = vld [vmem:[%s1073 + $0xb3] sm:$0xff]
  %v1626 = vld [vmem:[%s40 + $0x3] sm:$0xff]
  %v1627 = vld [vmem:[%s40 + $0xb] sm:$0xff]
  %v1628 = vld [vmem:[%s40 + $0x1b] sm:$0xff]
  %v1629 = vld [vmem:[%s40 + $0x23] sm:$0xff]
  %v1630 = vld [vmem:[%s40 + $0x33] sm:$0xff]
  %v1631 = vld [vmem:[%s40 + $0x3b] sm:$0xff]
  %v1632 = vld [vmem:[%s40 + $0x4b] sm:$0xff]
  %v1633 = vld [vmem:[%s40 + $0x53] sm:$0xff]
  %v1634 = vmul.f32 %v1610, %v673
  %v1635 = vmul.f32 %v1611, %v673
  %v1636 = vmul.f32 %v1612, %v673
  %v1637 = vmul.f32 %v1613, %v673
  %v1638 = vmul.f32 %v1614, %v673
  %v1639 = vmul.f32 %v1615, %v673
  %v1640 = vmul.f32 %v1616, %v673
  %v1641 = vmul.f32 %v1617, %v673
  %v1642 = vmul.f32 %v1618, %v673
  %v1643 = vmul.f32 %v1619, %v673
  %v1644 = vmul.f32 %v1620, %v673
  %v1645 = vmul.f32 %v1621, %v673
  %v1646 = vmul.f32 %v1622, %v673
  %v1647 = vmul.f32 %v1623, %v673
  %v1648 = vmul.f32 %v1624, %v673
  %v1649 = vmul.f32 %v1625, %v673
  %v1650 = vadd.f32 %v1594, %v1634
  %v1651 = vadd.f32 %v1595, %v1635
  %v1652 = vadd.f32 %v1596, %v1636
  %v1653 = vadd.f32 %v1597, %v1637
  %v1654 = vadd.f32 %v1598, %v1638
  %v1655 = vadd.f32 %v1599, %v1639
  %v1656 = vadd.f32 %v1600, %v1640
  %v1657 = vadd.f32 %v1601, %v1641
  %v1658 = vadd.f32 %v1602, %v1642
  %v1659 = vadd.f32 %v1603, %v1643
  %v1660 = vadd.f32 %v1604, %v1644
  %v1661 = vadd.f32 %v1605, %v1645
  %v1662 = vadd.f32 %v1606, %v1646
  %v1663 = vadd.f32 %v1607, %v1647
  %v1664 = vadd.f32 %v1608, %v1648
  %v1665 = vadd.f32 %v1609, %v1649
  %v1666 = vmul.f32 %v1612, %v709
  %v1667 = vmul.f32 %v1613, %v709
  %v1668 = vmul.f32 %v1614, %v709
  %v1669 = vmul.f32 %v1615, %v709
  %v1670 = vmul.f32 %v1616, %v709
  %v1671 = vmul.f32 %v1617, %v709
  %v1672 = vmul.f32 %v1618, %v709
  %v1673 = vmul.f32 %v1619, %v709
  %v1674 = vmul.f32 %v1620, %v709
  %v1675 = vmul.f32 %v1621, %v709
  %v1676 = vmul.f32 %v1622, %v709
  %v1677 = vmul.f32 %v1623, %v709
  %v1678 = vmul.f32 %v1624, %v709
  %v1679 = vmul.f32 %v1625, %v709
  %v1680 = vmul.f32 %v1626, %v709
  %v1681 = vmul.f32 %v1627, %v709
  %v1682 = vadd.f32 %v1650, %v1666
  %v1683 = vadd.f32 %v1651, %v1667
  %v1684 = vadd.f32 %v1652, %v1668
  %v1685 = vadd.f32 %v1653, %v1669
  %v1686 = vadd.f32 %v1654, %v1670
  %v1687 = vadd.f32 %v1655, %v1671
  %v1688 = vadd.f32 %v1656, %v1672
  %v1689 = vadd.f32 %v1657, %v1673
  %v1690 = vadd.f32 %v1658, %v1674
  %v1691 = vadd.f32 %v1659, %v1675
  %v1692 = vadd.f32 %v1660, %v1676
  %v1693 = vadd.f32 %v1661, %v1677
  %v1694 = vadd.f32 %v1662, %v1678
  %v1695 = vadd.f32 %v1663, %v1679
  %v1696 = vadd.f32 %v1664, %v1680
  %v1697 = vadd.f32 %v1665, %v1681
  %v1698 = vmul.f32 %v1614, %v745
  %v1699 = vmul.f32 %v1615, %v745
  %v1700 = vmul.f32 %v1616, %v745
  %v1701 = vmul.f32 %v1617, %v745
  %v1702 = vmul.f32 %v1618, %v745
  %v1703 = vmul.f32 %v1619, %v745
  %v1704 = vmul.f32 %v1620, %v745
  %v1705 = vmul.f32 %v1621, %v745
  %v1706 = vmul.f32 %v1622, %v745
  %v1707 = vmul.f32 %v1623, %v745
  %v1708 = vmul.f32 %v1624, %v745
  %v1709 = vmul.f32 %v1625, %v745
  %v1710 = vmul.f32 %v1626, %v745
  %v1711 = vmul.f32 %v1627, %v745
  %v1712 = vmul.f32 %v1628, %v745
  %v1713 = vmul.f32 %v1629, %v745
  %v1714 = vadd.f32 %v1682, %v1698
  %v1715 = vadd.f32 %v1683, %v1699
  %v1716 = vadd.f32 %v1684, %v1700
  %v1717 = vadd.f32 %v1685, %v1701
  %v1718 = vadd.f32 %v1686, %v1702
  %v1719 = vadd.f32 %v1687, %v1703
  %v1720 = vadd.f32 %v1688, %v1704
  %v1721 = vadd.f32 %v1689, %v1705
  %v1722 = vadd.f32 %v1690, %v1706
  %v1723 = vadd.f32 %v1691, %v1707
  %v1724 = vadd.f32 %v1692, %v1708
  %v1725 = vadd.f32 %v1693, %v1709
  %v1726 = vadd.f32 %v1694, %v1710
  %v1727 = vadd.f32 %v1695, %v1711
  %v1728 = vadd.f32 %v1696, %v1712
  %v1729 = vadd.f32 %v1697, %v1713
  %v1730 = vmul.f32 %v1616, %v781
  %v1731 = vmul.f32 %v1617, %v781
  %v1732 = vmul.f32 %v1618, %v781
  %v1733 = vmul.f32 %v1619, %v781
  %v1734 = vmul.f32 %v1620, %v781
  %v1735 = vmul.f32 %v1621, %v781
  %v1736 = vmul.f32 %v1622, %v781
  %v1737 = vmul.f32 %v1623, %v781
  %v1738 = vmul.f32 %v1624, %v781
  %v1739 = vmul.f32 %v1625, %v781
  %v1740 = vmul.f32 %v1626, %v781
  %v1741 = vmul.f32 %v1627, %v781
  %v1742 = vmul.f32 %v1628, %v781
  %v1743 = vmul.f32 %v1629, %v781
  %v1744 = vmul.f32 %v1630, %v781
  %v1745 = vmul.f32 %v1631, %v781
  %v1746 = vadd.f32 %v1714, %v1730
  %v1747 = vadd.f32 %v1715, %v1731
  %v1748 = vadd.f32 %v1716, %v1732
  %v1749 = vadd.f32 %v1717, %v1733
  %v1750 = vadd.f32 %v1718, %v1734
  %v1751 = vadd.f32 %v1719, %v1735
  %v1752 = vadd.f32 %v1720, %v1736
  %v1753 = vadd.f32 %v1721, %v1737
  %v1754 = vadd.f32 %v1722, %v1738
  %v1755 = vadd.f32 %v1723, %v1739
  %v1756 = vadd.f32 %v1724, %v1740
  %v1757 = vadd.f32 %v1725, %v1741
  %v1758 = vadd.f32 %v1726, %v1742
  %v1759 = vadd.f32 %v1727, %v1743
  %v1760 = vadd.f32 %v1728, %v1744
  %v1761 = vadd.f32 %v1729, %v1745
  %v1762 = vmul.f32 %v1618, %v817
  %v1763 = vmul.f32 %v1619, %v817
  %v1764 = vmul.f32 %v1620, %v817
  %v1765 = vmul.f32 %v1621, %v817
  %v1766 = vmul.f32 %v1622, %v817
  %v1767 = vmul.f32 %v1623, %v817
  %v1768 = vmul.f32 %v1624, %v817
  %v1769 = vmul.f32 %v1625, %v817
  %v1770 = vmul.f32 %v1626, %v817
  %v1771 = vmul.f32 %v1627, %v817
  %v1772 = vmul.f32 %v1628, %v817
  %v1773 = vmul.f32 %v1629, %v817
  %v1774 = vmul.f32 %v1630, %v817
  %v1775 = vmul.f32 %v1631, %v817
  %v1776 = vmul.f32 %v1632, %v817
  %v1777 = vmul.f32 %v1633, %v817
  %v1778 = vadd.f32 %v1746, %v1762
  %v1779 = vadd.f32 %v1747, %v1763
  %v1780 = vadd.f32 %v1748, %v1764
  %v1781 = vadd.f32 %v1749, %v1765
  %v1782 = vadd.f32 %v1750, %v1766
  %v1783 = vadd.f32 %v1751, %v1767
  %v1784 = vadd.f32 %v1752, %v1768
  %v1785 = vadd.f32 %v1753, %v1769
  %v1786 = vadd.f32 %v1754, %v1770
  %v1787 = vadd.f32 %v1755, %v1771
  %v1788 = vadd.f32 %v1756, %v1772
  %v1789 = vadd.f32 %v1757, %v1773
  %v1790 = vadd.f32 %v1758, %v1774
  %v1791 = vadd.f32 %v1759, %v1775
  %v1792 = vadd.f32 %v1760, %v1776
  %v1793 = vadd.f32 %v1761, %v1777
  %v1794 = vld [vmem:[%s1073 + $0x4] sm:$0xff]
  %v1795 = vld [vmem:[%s1073 + $0xc] sm:$0xff]
  %v1796 = vld [vmem:[%s1073 + $0x1c] sm:$0xff]
  %v1797 = vld [vmem:[%s1073 + $0x24] sm:$0xff]
  %v1798 = vld [vmem:[%s1073 + $0x34] sm:$0xff]
  %v1799 = vld [vmem:[%s1073 + $0x3c] sm:$0xff]
  %v1800 = vld [vmem:[%s1073 + $0x4c] sm:$0xff]
  %v1801 = vld [vmem:[%s1073 + $0x54] sm:$0xff]
  %v1802 = vld [vmem:[%s1073 + $0x64] sm:$0xff]
  %v1803 = vld [vmem:[%s1073 + $0x6c] sm:$0xff]
  %v1804 = vld [vmem:[%s1073 + $0x7c] sm:$0xff]
  %v1805 = vld [vmem:[%s1073 + $0x84] sm:$0xff]
  %v1806 = vld [vmem:[%s1073 + $0x94] sm:$0xff]
  %v1807 = vld [vmem:[%s1073 + $0x9c] sm:$0xff]
  %v1808 = vld [vmem:[%s1073 + $0xac] sm:$0xff]
  %v1809 = vld [vmem:[%s1073 + $0xb4] sm:$0xff]
  %v1810 = vld [vmem:[%s40 + $0x4] sm:$0xff]
  %v1811 = vld [vmem:[%s40 + $0xc] sm:$0xff]
  %v1812 = vld [vmem:[%s40 + $0x1c] sm:$0xff]
  %v1813 = vld [vmem:[%s40 + $0x24] sm:$0xff]
  %v1814 = vld [vmem:[%s40 + $0x34] sm:$0xff]
  %v1815 = vld [vmem:[%s40 + $0x3c] sm:$0xff]
  %v1816 = vld [vmem:[%s40 + $0x4c] sm:$0xff]
  %v1817 = vld [vmem:[%s40 + $0x54] sm:$0xff]
  %v1818 = vmul.f32 %v1794, %v877
  %v1819 = vmul.f32 %v1795, %v877
  %v1820 = vmul.f32 %v1796, %v877
  %v1821 = vmul.f32 %v1797, %v877
  %v1822 = vmul.f32 %v1798, %v877
  %v1823 = vmul.f32 %v1799, %v877
  %v1824 = vmul.f32 %v1800, %v877
  %v1825 = vmul.f32 %v1801, %v877
  %v1826 = vmul.f32 %v1802, %v877
  %v1827 = vmul.f32 %v1803, %v877
  %v1828 = vmul.f32 %v1804, %v877
  %v1829 = vmul.f32 %v1805, %v877
  %v1830 = vmul.f32 %v1806, %v877
  %v1831 = vmul.f32 %v1807, %v877
  %v1832 = vmul.f32 %v1808, %v877
  %v1833 = vmul.f32 %v1809, %v877
  %v1834 = vadd.f32 %v1778, %v1818
  %v1835 = vadd.f32 %v1779, %v1819
  %v1836 = vadd.f32 %v1780, %v1820
  %v1837 = vadd.f32 %v1781, %v1821
  %v1838 = vadd.f32 %v1782, %v1822
  %v1839 = vadd.f32 %v1783, %v1823
  %v1840 = vadd.f32 %v1784, %v1824
  %v1841 = vadd.f32 %v1785, %v1825
  %v1842 = vadd.f32 %v1786, %v1826
  %v1843 = vadd.f32 %v1787, %v1827
  %v1844 = vadd.f32 %v1788, %v1828
  %v1845 = vadd.f32 %v1789, %v1829
  %v1846 = vadd.f32 %v1790, %v1830
  %v1847 = vadd.f32 %v1791, %v1831
  %v1848 = vadd.f32 %v1792, %v1832
  %v1849 = vadd.f32 %v1793, %v1833
  %v1850 = vmul.f32 %v1796, %v913
  %v1851 = vmul.f32 %v1797, %v913
  %v1852 = vmul.f32 %v1798, %v913
  %v1853 = vmul.f32 %v1799, %v913
  %v1854 = vmul.f32 %v1800, %v913
  %v1855 = vmul.f32 %v1801, %v913
  %v1856 = vmul.f32 %v1802, %v913
  %v1857 = vmul.f32 %v1803, %v913
  %v1858 = vmul.f32 %v1804, %v913
  %v1859 = vmul.f32 %v1805, %v913
  %v1860 = vmul.f32 %v1806, %v913
  %v1861 = vmul.f32 %v1807, %v913
  %v1862 = vmul.f32 %v1808, %v913
  %v1863 = vmul.f32 %v1809, %v913
  %v1864 = vmul.f32 %v1810, %v913
  %v1865 = vmul.f32 %v1811, %v913
  %v1866 = vadd.f32 %v1834, %v1850
  %v1867 = vadd.f32 %v1835, %v1851
  %v1868 = vadd.f32 %v1836, %v1852
  %v1869 = vadd.f32 %v1837, %v1853
  %v1870 = vadd.f32 %v1838, %v1854
  %v1871 = vadd.f32 %v1839, %v1855
  %v1872 = vadd.f32 %v1840, %v1856
  %v1873 = vadd.f32 %v1841, %v1857
  %v1874 = vadd.f32 %v1842, %v1858
  %v1875 = vadd.f32 %v1843, %v1859
  %v1876 = vadd.f32 %v1844, %v1860
  %v1877 = vadd.f32 %v1845, %v1861
  %v1878 = vadd.f32 %v1846, %v1862
  %v1879 = vadd.f32 %v1847, %v1863
  %v1880 = vadd.f32 %v1848, %v1864
  %v1881 = vadd.f32 %v1849, %v1865
  %v1882 = vmul.f32 %v1798, %v949
  %v1883 = vmul.f32 %v1799, %v949
  %v1884 = vmul.f32 %v1800, %v949
  %v1885 = vmul.f32 %v1801, %v949
  %v1886 = vmul.f32 %v1802, %v949
  %v1887 = vmul.f32 %v1803, %v949
  %v1888 = vmul.f32 %v1804, %v949
  %v1889 = vmul.f32 %v1805, %v949
  %v1890 = vmul.f32 %v1806, %v949
  %v1891 = vmul.f32 %v1807, %v949
  %v1892 = vmul.f32 %v1808, %v949
  %v1893 = vmul.f32 %v1809, %v949
  %v1894 = vmul.f32 %v1810, %v949
  %v1895 = vmul.f32 %v1811, %v949
  %v1896 = vmul.f32 %v1812, %v949
  %v1897 = vmul.f32 %v1813, %v949
  %v1898 = vadd.f32 %v1866, %v1882
  %v1899 = vadd.f32 %v1867, %v1883
  %v1900 = vadd.f32 %v1868, %v1884
  %v1901 = vadd.f32 %v1869, %v1885
  %v1902 = vadd.f32 %v1870, %v1886
  %v1903 = vadd.f32 %v1871, %v1887
  %v1904 = vadd.f32 %v1872, %v1888
  %v1905 = vadd.f32 %v1873, %v1889
  %v1906 = vadd.f32 %v1874, %v1890
  %v1907 = vadd.f32 %v1875, %v1891
  %v1908 = vadd.f32 %v1876, %v1892
  %v1909 = vadd.f32 %v1877, %v1893
  %v1910 = vadd.f32 %v1878, %v1894
  %v1911 = vadd.f32 %v1879, %v1895
  %v1912 = vadd.f32 %v1880, %v1896
  %v1913 = vadd.f32 %v1881, %v1897
  %v1914 = vmul.f32 %v1800, %v985
  %v1915 = vmul.f32 %v1801, %v985
  %v1916 = vmul.f32 %v1802, %v985
  %v1917 = vmul.f32 %v1803, %v985
  %v1918 = vmul.f32 %v1804, %v985
  %v1919 = vmul.f32 %v1805, %v985
  %v1920 = vmul.f32 %v1806, %v985
  %v1921 = vmul.f32 %v1807, %v985
  %v1922 = vmul.f32 %v1808, %v985
  %v1923 = vmul.f32 %v1809, %v985
  %v1924 = vmul.f32 %v1810, %v985
  %v1925 = vmul.f32 %v1811, %v985
  %v1926 = vmul.f32 %v1812, %v985
  %v1927 = vmul.f32 %v1813, %v985
  %v1928 = vmul.f32 %v1814, %v985
  %v1929 = vmul.f32 %v1815, %v985
  %v1930 = vadd.f32 %v1898, %v1914
  %v1931 = vadd.f32 %v1899, %v1915
  %v1932 = vadd.f32 %v1900, %v1916
  %v1933 = vadd.f32 %v1901, %v1917
  %v1934 = vadd.f32 %v1902, %v1918
  %v1935 = vadd.f32 %v1903, %v1919
  %v1936 = vadd.f32 %v1904, %v1920
  %v1937 = vadd.f32 %v1905, %v1921
  %v1938 = vadd.f32 %v1906, %v1922
  %v1939 = vadd.f32 %v1907, %v1923
  %v1940 = vadd.f32 %v1908, %v1924
  %v1941 = vadd.f32 %v1909, %v1925
  %v1942 = vadd.f32 %v1910, %v1926
  %v1943 = vadd.f32 %v1911, %v1927
  %v1944 = vadd.f32 %v1912, %v1928
  %v1945 = vadd.f32 %v1913, %v1929
  %v1946 = vmul.f32 %v1802, %v1021
  %v1947 = vmul.f32 %v1803, %v1021
  %v1948 = vmul.f32 %v1804, %v1021
  %v1949 = vmul.f32 %v1805, %v1021
  %v1950 = vmul.f32 %v1806, %v1021
  %v1951 = vmul.f32 %v1807, %v1021
  %v1952 = vmul.f32 %v1808, %v1021
  %v1953 = vmul.f32 %v1809, %v1021
  %v1954 = vmul.f32 %v1810, %v1021
  %v1955 = vmul.f32 %v1811, %v1021
  %v1956 = vmul.f32 %v1812, %v1021
  %v1957 = vmul.f32 %v1813, %v1021
  %v1958 = vmul.f32 %v1814, %v1021
  %v1959 = vmul.f32 %v1815, %v1021
  %v1960 = vmul.f32 %v1816, %v1021
  %v1961 = vmul.f32 %v1817, %v1021
  %v1962 = vadd.f32 %v1930, %v1946
  %v1963 = vadd.f32 %v1931, %v1947
  %v1964 = vadd.f32 %v1932, %v1948
  %v1965 = vadd.f32 %v1933, %v1949
  %v1966 = vadd.f32 %v1934, %v1950
  %v1967 = vadd.f32 %v1935, %v1951
  %v1968 = vadd.f32 %v1936, %v1952
  %v1969 = vadd.f32 %v1937, %v1953
  %v1970 = vadd.f32 %v1938, %v1954
  %v1971 = vadd.f32 %v1939, %v1955
  %v1972 = vadd.f32 %v1940, %v1956
  %v1973 = vadd.f32 %v1941, %v1957
  %v1974 = vadd.f32 %v1942, %v1958
  %v1975 = vadd.f32 %v1943, %v1959
  %v1976 = vadd.f32 %v1944, %v1960
  %v1977 = vadd.f32 %v1945, %v1961
  %s1978 = scalar_lea.vmem %s3, 128
  %1979 = vst.msk [vmem:[%s1978] sm:$0xff] %vm1056, %v1962
  %1980 = vst.msk [vmem:[%s1978 + $0x8] sm:$0xff] %vm1056, %v1963
  %1981 = vst.msk [vmem:[%s1978 + $0x10] sm:$0xff] %vm1056, %v1964
  %1982 = vst.msk [vmem:[%s1978 + $0x18] sm:$0xff] %vm1056, %v1965
  %1983 = vst.msk [vmem:[%s1978 + $0x20] sm:$0xff] %vm1056, %v1966
  %1984 = vst.msk [vmem:[%s1978 + $0x28] sm:$0xff] %vm1056, %v1967
  %1985 = vst.msk [vmem:[%s1978 + $0x30] sm:$0xff] %vm1056, %v1968
  %1986 = vst.msk [vmem:[%s1978 + $0x38] sm:$0xff] %vm1056, %v1969
  %1987 = vst.msk [vmem:[%s1978 + $0x40] sm:$0xff] %vm1056, %v1970
  %1988 = vst.msk [vmem:[%s1978 + $0x48] sm:$0xff] %vm1056, %v1971
  %1989 = vst.msk [vmem:[%s1978 + $0x50] sm:$0xff] %vm1056, %v1972
  %1990 = vst.msk [vmem:[%s1978 + $0x58] sm:$0xff] %vm1056, %v1973
  %1991 = vst.msk [vmem:[%s1978 + $0x60] sm:$0xff] %vm1056, %v1974
  %1992 = vst.msk [vmem:[%s1978 + $0x68] sm:$0xff] %vm1056, %v1975
  %1993 = vst.msk [vmem:[%s1978 + $0x70] sm:$0xff] %vm1056, %v1976
  %1994 = vst.msk [vmem:[%s1978 + $0x78] sm:$0xff] %vm1056, %v1977
  // Predicated region
  $region14: #{tpu_custom_call.1} parent=0 // pred_check
    _
  $region15: #{tpu_custom_call.1} parent=0 // pred_check_branch
    %1996 = sbr.rel (0) target = $region17
  $region16: #{tpu_custom_call.1} parent=0 // pred_region
    _
  $region17: #{tpu_custom_call.1} parent=0 // pred_fallthru
    _
  // Predicated region
  $region18: #{tpu_custom_call.1} parent=0 // pred_check
    _
  $region19: #{tpu_custom_call.1} parent=0 // pred_check_branch
    %1998 = sbr.rel (0) target = $region21
  $region20: #{tpu_custom_call.1} parent=0 // pred_region
    _
  $region21: #{tpu_custom_call.1} parent=0 // pred_fallthru
    _

</llo_original>
